<compile_context>
chip_gen: v5e
topology: v5e:2x2
jax: 0.10.0
libtpu: 0.0.40
codegen_flags: <defaults>
</compile_context>

<pallas_src>
import math
from functools import partial

import jax
import jax.numpy as jnp
from jax import lax
from jax.experimental import pallas as pl
from jax.experimental.pallas import tpu as pltpu


# ---------------------------------------------------------------------------
# One-time capability / generation probes (no per-call fallbacks).
# ---------------------------------------------------------------------------
def _device_kind() -> str:
    try:
        return jax.devices()[0].device_kind.lower()
    except Exception:
        return ""


_KIND = _device_kind()
_IS_V5E = ("v5 lite" in _KIND) or ("v5e" in _KIND) or ("v5litepod" in _KIND)
_IS_V7 = "v7" in _KIND
# v5e has no bf16 EUP/VPU; v6e/v7x do -> compute exp in bf16 there.
_USE_BF16_EXP = not _IS_V5E


def _probe_single_buffering() -> bool:
    """Can we request single-buffering (pl.Buffered(1)) for grid-invariant blocks?"""
    try:
        pl.BlockSpec((8, 128), lambda i, j: (0, 0), pipeline_mode=pl.Buffered(1))
        return True
    except Exception:
        return False


_SINGLE_BUFFER = _probe_single_buffering()


def _vmem_limit_bytes() -> int:
    phys = None
    try:
        phys = int(getattr(pltpu.get_tpu_info(), "vmem_capacity_bytes", 0)) or None
    except Exception:
        phys = None
    if phys is None:
        phys = (64 << 20) if _IS_V7 else (128 << 20)
    target = (56 << 20) if _IS_V7 else (100 << 20)   # leave compiler-scratch headroom
    return max(32 << 20, min(phys - (8 << 20), target))


def _pick_tq(s_pad, num_heads, d_model, score_bytes, vmem_limit):
    """Largest query tile whose estimated VMEM working set fits the budget."""
    # v5e: 128-wide MXU, tq=128 already fills it; v7x: only 64 MiB VMEM -> cap at 128.
    cap = 128 if (_IS_V7 or _IS_V5E) else 512
    kv_bufs = 1 if _SINGLE_BUFFER else 2
    w_bufs = 1 if _SINGLE_BUFFER else 2
    for tq in (512, 256, 128):
        if tq > cap or s_pad % tq != 0:
            continue
        need = 0
        need += 2 * num_heads * tq * s_pad * score_bytes          # score out (2 bufs)
        need += 2 * d_model * tq * 4                              # out block (f32, 2 bufs)
        need += 2 * d_model * tq * 2                              # q block (bf16, 2 bufs)
        need += 2 * kv_bufs * d_model * s_pad * 2                 # projected K, V (bf16)
        need += 2 * w_bufs * (d_model * d_model * 2 + d_model * 4)  # Wq/Wo + biases
        need += 3 * num_heads * tq * s_pad * 4                    # live f32 softmax temps
        need += num_heads * tq * s_pad * 2                        # attn (bf16)
        need += 4 * d_model * tq * 4                              # Q / Qs / ctx temps
        if need <= int(vmem_limit * 0.85):
            return tq
    return 128


# ---------------------------------------------------------------------------
# Kernel
# ---------------------------------------------------------------------------
def _evolut_mha_kernel(q_ref, k_ref, v_ref, wq_ref, bqu_ref, wo_ref, bo_ref,
                       out_ref, score_ref, *,
                       num_heads, d_head, inv_sqrt_dim, seq_len, s_pad, tq,
                       use_bf16_exp):
    # Q projection for this query tile (bf16 x bf16 on the MXU, f32 accumulation).
    # (bq + u_bias) were folded into one bias in the wrapper; 1/sqrt(d_model) is
    # folded into the projected Q (O(d_model*tq) VALU work instead of O(H*tq*S)).
    Q = jnp.dot(wq_ref[...], q_ref[...],
                preferred_element_type=jnp.float32) + bqu_ref[...]
    Qs = (Q * inv_sqrt_dim).reshape(num_heads, d_head, tq).astype(jnp.bfloat16)

    K = k_ref[...].reshape(num_heads, d_head, s_pad)   # projected keys   (bf16)
    V = v_ref[...].reshape(num_heads, d_head, s_pad)   # projected values (bf16)

    # content score: 'b h k i, b h k j -> b h i j' == head-batched contraction over d_head.
    scores = lax.dot_general(
        Qs, K, dimension_numbers=(((1,), (1,)), ((0,), (0,))),
        preferred_element_type=jnp.float32)            # (H, tq, s_pad) f32

    # Returned score (already scaled by 1/sqrt(d_model)).  bf16 by default: the
    # (B,H,S,S) writeback is the dominant HBM traffic at realistic S.
    score_ref[...] = scores.astype(score_ref.dtype)

    # Softmax over keys; padded key columns (j >= seq_len) masked with a small
    # (1,1,s_pad) broadcast additive mask.
    if s_pad > seq_len:
        col = lax.broadcasted_iota(jnp.int32, (1, 1, s_pad), 2)
        scores = scores + jnp.where(col < seq_len, 0.0, -1e9).astype(jnp.float32)
    m = jnp.max(scores, axis=-1, keepdims=True)
    x = scores - m
    if use_bf16_exp:
        e = jnp.exp(x.astype(jnp.bfloat16))                              # bf16 EUP path
        denom = jnp.sum(e, axis=-1, keepdims=True, dtype=jnp.float32)
        attn = e * pl.reciprocal(denom, approx=True).astype(jnp.bfloat16)
    else:
        e = jnp.exp(x)                                                   # f32 (v5e)
        denom = jnp.sum(e, axis=-1, keepdims=True)
        attn = (e * pl.reciprocal(denom, approx=True)).astype(jnp.bfloat16)

    # TODO(synk): edge_weights path (3x3 Conv2d `evolut_fusion`) and the boolean mask
    #             path are not implemented; forward is exercised with defaults (None).

    # context: 'b h i j, b h k j -> b h k i' == head-batched contraction over keys.
    ctx = lax.dot_general(
        V, attn, dimension_numbers=(((2,), (2,)), ((0,), (0,))),
        preferred_element_type=jnp.float32)            # (H, d_head, tq)

    context = ctx.reshape(num_heads * d_head, tq).astype(jnp.bfloat16)
    out_ref[...] = jnp.dot(wo_ref[...], context,
                           preferred_element_type=jnp.float32) + bo_ref[...]


# ---------------------------------------------------------------------------
# Wrapper
# ---------------------------------------------------------------------------
def evolut_mha_forward(query, key, value, pos_embedding, params, *, num_heads,
                       score_dtype=jnp.bfloat16):
    """Pallas EvolutMultiHeadAttention.forward (mask=None, edge_weights=None).

    `score_dtype` defaults to bf16 (halves the dominant (B,H,S,S) HBM writeback);
    pass jnp.float32 for full-precision parity with the PyTorch module's score output.
    """
    del pos_embedding  # unused by the PyTorch forward as well
    B, d_model, S = query.shape
    assert d_model % num_heads == 0
    d_head = d_model // num_heads
    inv_sqrt_dim = 1.0 / math.sqrt(d_model)

    # Pad the sequence axis so every block is lane-dense (last dim multiple of 128).
    s_pad = ((S + 127) // 128) * 128
    vmem_limit = _vmem_limit_bytes()
    score_bytes = jnp.dtype(score_dtype).itemsize
    tq = _pick_tq(s_pad, num_heads, d_model, score_bytes, vmem_limit)
    nq = s_pad // tq

    # bf16 projection weights (f32 accumulation inside every matmul).
    wq = params["wq"].astype(jnp.bfloat16)
    wk = params["wk"].astype(jnp.bfloat16)
    wv = params["wv"].astype(jnp.bfloat16)
    wo = params["wo"].astype(jnp.bfloat16)
    bq = params["bq"].reshape(d_model, 1).astype(jnp.float32)
    bk = params["bk"].reshape(d_model, 1).astype(jnp.float32)
    bv = params["bv"].reshape(d_model, 1).astype(jnp.float32)
    bo = params["bo"].reshape(d_model, 1).astype(jnp.float32)
    bqu = bq + params["u_bias"].reshape(d_model, 1)   # fold u_bias into the query bias

    # Hoisted K/V projections (plain XLA einsum, bf16 x bf16, f32 acc): the kernel only
    # ever sees the projected bf16 (d_model, s_pad) K/V slabs.
    def proj(x, w, b):
        y = jnp.einsum("oc,bcs->bos", w, x.astype(jnp.bfloat16),
                       preferred_element_type=jnp.float32) + b[None]
        return y.astype(jnp.bfloat16)

    k_proj = proj(key, wk, bk)
    v_proj = proj(value, wv, bv)
    q_in = query.astype(jnp.bfloat16)
    if s_pad > S:
        padw = ((0, 0), (0, 0), (0, s_pad - S))
        q_in = jnp.pad(q_in, padw)
        k_proj = jnp.pad(k_proj, padw)
        v_proj = jnp.pad(v_proj, padw)

    kernel = partial(_evolut_mha_kernel, num_heads=num_heads, d_head=d_head,
                     inv_sqrt_dim=inv_sqrt_dim, seq_len=S, s_pad=s_pad, tq=tq,
                     use_bf16_exp=_USE_BF16_EXP)

    # Advisory cost estimate (score writeback dominates bytes at large S).
    flops = B * (4 * d_model * d_model * s_pad + 4 * d_model * s_pad * s_pad)
    transc = B * num_heads * s_pad * s_pad
    bytes_accessed = (2 * 3 * B * d_model * s_pad            # bf16 q / K / V inputs
                      + 2 * 2 * d_model * d_model            # bf16 Wq / Wo
                      + 4 * B * d_model * s_pad              # f32 out
                      + score_bytes * B * num_heads * s_pad * s_pad)
    cost = pl.CostEstimate(flops=int(flops), transcendentals=int(transc),
                           bytes_accessed=int(bytes_accessed))

    # Grid-invariant blocks (weights, projected K/V whose index_map is constant along
    # the query axis) are single-buffered: double buffering them is pure VMEM waste.
    single = {"pipeline_mode": pl.Buffered(1)} if _SINGLE_BUFFER else {}
    q_spec = pl.BlockSpec((None, d_model, tq), lambda b, q: (b, 0, q))
    kv_spec = pl.BlockSpec((None, d_model, s_pad), lambda b, q: (b, 0, 0), **single)
    mat_spec = pl.BlockSpec((d_model, d_model), lambda b, q: (0, 0), **single)
    vec_spec = pl.BlockSpec((d_model, 1), lambda b, q: (0, 0), **single)

    call = pl.pallas_call(
        kernel,
        out_shape=(
            jax.ShapeDtypeStruct((B, d_model, s_pad), jnp.float32),
            jax.ShapeDtypeStruct((B, num_heads, s_pad, s_pad), score_dtype),
        ),
        grid_spec=pltpu.PrefetchScalarGridSpec(
            num_scalar_prefetch=0,
            grid=(B, nq),
            in_specs=[
                q_spec, kv_spec, kv_spec,   # raw query, projected K, projected V
                mat_spec, vec_spec,         # Wq, (bq + u_bias)
                mat_spec, vec_spec,         # Wo, bo
            ],
            out_specs=[
                pl.BlockSpec((None, d_model, tq), lambda b, q: (b, 0, q)),
                pl.BlockSpec((None, num_heads, tq, s_pad), lambda b, q: (b, 0, q, 0)),
            ],
        ),
        compiler_params=pltpu.CompilerParams(
            dimension_semantics=("parallel", "parallel"),
            vmem_limit_bytes=vmem_limit),
        cost_estimate=cost,
    )

    out_p, score_p = call(q_in, k_proj, v_proj, wq, bqu, wo, bo)

    # Strip the sequence padding (padded rows/cols contain unmasked garbage by design;
    # they are never returned).
    return out_p[:, :, :S], score_p[:, :, :S, :S]


# ---------------------------------------------------------------------------
# Pure-JAX reference + test harness
# ---------------------------------------------------------------------------
def _reference_forward(query, key, value, params, *, num_heads):
    """Pure-JAX (f32) re-implementation of the PyTorch forward (for verification)."""
    B, d_model, S = query.shape
    d_head = d_model // num_heads
    sqrt_dim = math.sqrt(d_model)

    def proj(x, w, b):
        return jnp.einsum("oc,bcs->bos", w, x) + b.reshape(1, d_model, 1)

    q = proj(query, params["wq"], params["bq"].reshape(-1)).reshape(B, num_heads, d_head, S)
    k = proj(key, params["wk"], params["bk"].reshape(-1)).reshape(B, num_heads, d_head, S)
    v = proj(value, params["wv"], params["bv"].reshape(-1)).reshape(B, num_heads, d_head, S)

    u = params["u_bias"].reshape(1, num_heads, d_head, 1)
    content_score = jnp.einsum("bhki,bhkj->bhij", q + u, k)
    score = content_score / sqrt_dim
    attn = jax.nn.softmax(score, axis=-1)
    context = jnp.einsum("bhij,bhkj->bhki", attn, v).reshape(B, d_model, S)
    out = proj(context, params["wo"], params["bo"].reshape(-1))
    return out, score


def _init_params(key, d_model, num_heads):
    d_head = d_model // num_heads
    ks = jax.random.split(key, 9)
    scale = 1.0 / math.sqrt(d_model)
    params = {
        "wq": jax.random.uniform(ks[0], (d_model, d_model), jnp.float32, -scale, scale),
        "bq": jax.random.uniform(ks[1], (d_model, 1), jnp.float32, -scale, scale),
        "wk": jax.random.uniform(ks[2], (d_model, d_model), jnp.float32, -scale, scale),
        "bk": jax.random.uniform(ks[3], (d_model, 1), jnp.float32, -scale, scale),
        "wv": jax.random.uniform(ks[4], (d_model, d_model), jnp.float32, -scale, scale),
        "bv": jax.random.uniform(ks[5], (d_model, 1), jnp.float32, -scale, scale),
        "wo": jax.random.uniform(ks[6], (d_model, d_model), jnp.float32, -scale, scale),
        "bo": jax.random.uniform(ks[7], (d_model, 1), jnp.float32, -scale, scale),
        # xavier-uniform-ish deterministic init for u_bias (H, d_head, 1)
        "u_bias": jax.random.uniform(
            ks[8], (num_heads, d_head, 1), jnp.float32,
            -math.sqrt(6.0 / (d_head + 1)), math.sqrt(6.0 / (d_head + 1))),
    }
    return params


if __name__ == "__main__":
    B, d_model, num_heads, S = 2, 32, 4, 8

    root = jax.random.PRNGKey(0)
    k_q, k_k, k_v, k_p, k_params = jax.random.split(root, 5)

    query = jax.random.normal(k_q, (B, d_model, S), jnp.float32)
    key_t = jax.random.normal(k_k, (B, d_model, S), jnp.float32)
    value = jax.random.normal(k_v, (B, d_model, S), jnp.float32)
    pos_embedding = jax.random.normal(k_p, (B, d_model, S), jnp.float32)  # unused (as in torch)

    params = _init_params(k_params, d_model, num_heads)

    out, score = evolut_mha_forward(query, key_t, value, pos_embedding,
                                    params, num_heads=num_heads)
    jax.block_until_ready((out, score))

    # Verify against the pure-JAX f32 reference.  The kernel runs bf16 MXU operands,
    # bf16 score output and approx reciprocal, so tolerances are set accordingly.
    ref_out, ref_score = _reference_forward(query, key_t, value, params,
                                            num_heads=num_heads)
    assert out.shape == (B, d_model, S) and score.shape == (B, num_heads, S, S)
    assert jnp.allclose(score.astype(jnp.float32), ref_score,
                        atol=5e-2, rtol=5e-2), "score mismatch"
    assert jnp.allclose(out, ref_out, atol=5e-2, rtol=5e-2), "output mismatch"

    print("KERNEL_OK")
</pallas_src>

<mosaic_0001>
module attributes {stable_mosaic.version = 11 : i64} {
  func.func @_evolut_mha_kernel(%arg0: i32, %arg1: i32, %arg2: memref<1x32x128xbf16, #tpu.memory_space<vmem>>, %arg3: memref<1x32x128xbf16, #tpu.memory_space<vmem>>, %arg4: memref<1x32x128xbf16, #tpu.memory_space<vmem>>, %arg5: memref<32x32xbf16, #tpu.memory_space<vmem>>, %arg6: memref<32x1xf32, #tpu.memory_space<vmem>>, %arg7: memref<32x32xbf16, #tpu.memory_space<vmem>>, %arg8: memref<32x1xf32, #tpu.memory_space<vmem>>, %arg9: memref<1x32x128xf32, #tpu.memory_space<vmem>>, %arg10: memref<1x4x128x128xbf16, #tpu.memory_space<vmem>>) attributes {dimension_semantics = [#tpu.dimension_semantics<parallel>, #tpu.dimension_semantics<parallel>], iteration_bounds = array<i64: 2, 1>, scalar_prefetch = 0 : i64, scratch_operands = 0 : i64, tpu.core_type = #tpu.core_type<tc>, window_params = [{transform_indices = @transform_0, window_bounds = array<i64: 1, 32, 128>}, {pipeline_mode = #tpu.pipeline_mode<synchronous>, transform_indices = @transform_1, window_bounds = array<i64: 1, 32, 128>}, {pipeline_mode = #tpu.pipeline_mode<synchronous>, transform_indices = @transform_2, window_bounds = array<i64: 1, 32, 128>}, {pipeline_mode = #tpu.pipeline_mode<synchronous>, transform_indices = @transform_3, window_bounds = array<i64: 32, 32>}, {pipeline_mode = #tpu.pipeline_mode<synchronous>, transform_indices = @transform_4, window_bounds = array<i64: 32, 1>}, {pipeline_mode = #tpu.pipeline_mode<synchronous>, transform_indices = @transform_5, window_bounds = array<i64: 32, 32>}, {pipeline_mode = #tpu.pipeline_mode<synchronous>, transform_indices = @transform_6, window_bounds = array<i64: 32, 1>}, {transform_indices = @transform_7, window_bounds = array<i64: 1, 32, 128>}, {transform_indices = @transform_8, window_bounds = array<i64: 1, 4, 128, 128>}]} {
    %c0 = arith.constant 0 : index
    %c0_0 = arith.constant 0 : index
    %0 = vector.load %arg5[%c0, %c0_0] : memref<32x32xbf16, #tpu.memory_space<vmem>>, vector<32x32xbf16>
    %c0_1 = arith.constant 0 : index
    %c0_2 = arith.constant 0 : index
    %c0_3 = arith.constant 0 : index
    %1 = vector.load %arg2[%c0_1, %c0_2, %c0_3] : memref<1x32x128xbf16, #tpu.memory_space<vmem>>, vector<1x32x128xbf16>
    %2 = vector.shape_cast %1 : vector<1x32x128xbf16> to vector<32x128xbf16>
    %cst = arith.constant dense<0.000000e+00> : vector<32x128xf32>
    %3 = tpu.matmul %0, %2, %cst {dimension_numbers = #tpu.dot_dimension_numbers<[1], [0], [0], [1], [0, 0, 1, 1], [], []>} : vector<32x32xbf16>, vector<32x128xbf16>, vector<32x128xf32> -> vector<32x128xf32>
    %c0_4 = arith.constant 0 : index
    %c0_5 = arith.constant 0 : index
    %4 = vector.load %arg6[%c0_4, %c0_5] : memref<32x1xf32, #tpu.memory_space<vmem>>, vector<32x1xf32>
    %5 = vector.broadcast %4 : vector<32x1xf32> to vector<32x128xf32>
    %6 = arith.addf %3, %5 : vector<32x128xf32>
    %cst_6 = arith.constant 0.176776692 : f32
    %7 = vector.broadcast %cst_6 : f32 to vector<32x128xf32>
    %8 = arith.mulf %6, %7 : vector<32x128xf32>
    %9 = vector.shape_cast %8 : vector<32x128xf32> to vector<4x8x128xf32>
    %10 = arith.truncf %9 : vector<4x8x128xf32> to vector<4x8x128xbf16>
    %c0_7 = arith.constant 0 : index
    %c0_8 = arith.constant 0 : index
    %c0_9 = arith.constant 0 : index
    %11 = vector.load %arg3[%c0_7, %c0_8, %c0_9] : memref<1x32x128xbf16, #tpu.memory_space<vmem>>, vector<1x32x128xbf16>
    %12 = vector.shape_cast %11 : vector<1x32x128xbf16> to vector<32x128xbf16>
    %13 = vector.shape_cast %12 : vector<32x128xbf16> to vector<4x8x128xbf16>
    %c0_10 = arith.constant 0 : index
    %c0_11 = arith.constant 0 : index
    %c0_12 = arith.constant 0 : index
    %14 = vector.load %arg4[%c0_10, %c0_11, %c0_12] : memref<1x32x128xbf16, #tpu.memory_space<vmem>>, vector<1x32x128xbf16>
    %15 = vector.shape_cast %14 : vector<1x32x128xbf16> to vector<32x128xbf16>
    %16 = vector.shape_cast %15 : vector<32x128xbf16> to vector<4x8x128xbf16>
    %cst_13 = arith.constant dense<0.000000e+00> : vector<4x128x128xf32>
    %17 = tpu.matmul %10, %13, %cst_13 {dimension_numbers = #tpu.dot_dimension_numbers<[1], [1], [2], [2], [0, 0, 0, 2, 1, 2], [0], [0]>} : vector<4x8x128xbf16>, vector<4x8x128xbf16>, vector<4x128x128xf32> -> vector<4x128x128xf32>
    %18 = arith.truncf %17 : vector<4x128x128xf32> to vector<4x128x128xbf16>
    %c0_14 = arith.constant 0 : index
    %c0_15 = arith.constant 0 : index
    %c0_16 = arith.constant 0 : index
    %c0_17 = arith.constant 0 : index
    %19 = vector.load %arg10[%c0_14, %c0_15, %c0_16, %c0_17] : memref<1x4x128x128xbf16, #tpu.memory_space<vmem>>, vector<1x4x128x128xbf16>
    %20 = vector.shape_cast %19 : vector<1x4x128x128xbf16> to vector<4x128x128xbf16>
    %21 = vector.shape_cast %18 : vector<4x128x128xbf16> to vector<1x4x128x128xbf16>
    tpu.vector_store %arg10[%c0_14, %c0_15, %c0_16, %c0_17], %21 {strides = array<i32>} : memref<1x4x128x128xbf16, #tpu.memory_space<vmem>>, vector<1x4x128x128xbf16>,
    %22 = tpu.iota {dimensions = array<i32: 2>} : vector<1x1x128xi32>
    %c8_i32 = arith.constant 8 : i32
    %23 = vector.broadcast %c8_i32 : i32 to vector<1x1x128xi32>
    %24 = arith.cmpi slt, %22, %23 : vector<1x1x128xi32>
    %cst_18 = arith.constant 0.000000e+00 : f32
    %cst_19 = arith.constant -1.000000e+09 : f32
    %25 = vector.broadcast %cst_18 : f32 to vector<1x1x128xf32>
    %26 = vector.broadcast %cst_19 : f32 to vector<1x1x128xf32>
    %27 = arith.select %24, %25, %26 : vector<1x1x128xi1>, vector<1x1x128xf32>
    %28 = vector.broadcast %27 : vector<1x1x128xf32> to vector<4x128x128xf32>
    %29 = arith.addf %17, %28 : vector<4x128x128xf32>
    %cst_20 = arith.constant dense<0xFF800000> : vector<4x128xf32>
    %30 = vector.multi_reduction <maximumf>, %29, %cst_20 [2] : vector<4x128x128xf32> to vector<4x128xf32>
    %31 = vector.shape_cast %30 : vector<4x128xf32> to vector<4x128x1xf32>
    %32 = vector.broadcast %31 : vector<4x128x1xf32> to vector<4x128x128xf32>
    %33 = arith.subf %29, %32 : vector<4x128x128xf32>
    %34 = arith.truncf %33 : vector<4x128x128xf32> to vector<4x128x128xbf16>
    %35 = math.exp %34 : vector<4x128x128xbf16>
    %36 = arith.extf %35 : vector<4x128x128xbf16> to vector<4x128x128xf32>
    %cst_21 = arith.constant dense<0.000000e+00> : vector<4x128xf32>
    %37 = vector.multi_reduction <add>, %36, %cst_21 [2] : vector<4x128x128xf32> to vector<4x128xf32>
    %38 = vector.shape_cast %37 : vector<4x128xf32> to vector<4x128x1xf32>
    %39 = tpu.reciprocal %38 {approx = true} : vector<4x128x1xf32> -> vector<4x128x1xf32>
    %40 = arith.truncf %39 : vector<4x128x1xf32> to vector<4x128x1xbf16>
    %41 = vector.broadcast %40 : vector<4x128x1xbf16> to vector<4x128x128xbf16>
    %42 = arith.mulf %35, %41 : vector<4x128x128xbf16>
    %cst_22 = arith.constant dense<0.000000e+00> : vector<4x8x128xf32>
    %43 = tpu.matmul %16, %42, %cst_22 {dimension_numbers = #tpu.dot_dimension_numbers<[2], [2], [1], [1], [0, 0, 0, 1, 1, 1], [0], [0]>} : vector<4x8x128xbf16>, vector<4x128x128xbf16>, vector<4x8x128xf32> -> vector<4x8x128xf32>
    %44 = vector.shape_cast %43 : vector<4x8x128xf32> to vector<32x128xf32>
    %45 = arith.truncf %44 : vector<32x128xf32> to vector<32x128xbf16>
    %c0_23 = arith.constant 0 : index
    %c0_24 = arith.constant 0 : index
    %46 = vector.load %arg7[%c0_23, %c0_24] : memref<32x32xbf16, #tpu.memory_space<vmem>>, vector<32x32xbf16>
    %cst_25 = arith.constant dense<0.000000e+00> : vector<32x128xf32>
    %47 = tpu.matmul %46, %45, %cst_25 {dimension_numbers = #tpu.dot_dimension_numbers<[1], [0], [0], [1], [0, 0, 1, 1], [], []>} : vector<32x32xbf16>, vector<32x128xbf16>, vector<32x128xf32> -> vector<32x128xf32>
    %c0_26 = arith.constant 0 : index
    %c0_27 = arith.constant 0 : index
    %48 = vector.load %arg8[%c0_26, %c0_27] : memref<32x1xf32, #tpu.memory_space<vmem>>, vector<32x1xf32>
    %49 = vector.broadcast %48 : vector<32x1xf32> to vector<32x128xf32>
    %50 = arith.addf %47, %49 : vector<32x128xf32>
    %c0_28 = arith.constant 0 : index
    %c0_29 = arith.constant 0 : index
    %c0_30 = arith.constant 0 : index
    %51 = vector.load %arg9[%c0_28, %c0_29, %c0_30] : memref<1x32x128xf32, #tpu.memory_space<vmem>>, vector<1x32x128xf32>
    %52 = vector.shape_cast %51 : vector<1x32x128xf32> to vector<32x128xf32>
    %53 = vector.shape_cast %50 : vector<32x128xf32> to vector<1x32x128xf32>
    tpu.vector_store %arg9[%c0_28, %c0_29, %c0_30], %53 {strides = array<i32>} : memref<1x32x128xf32, #tpu.memory_space<vmem>>, vector<1x32x128xf32>,
    return
  }
  func.func @transform_0(%arg0: i32, %arg1: i32) -> (i32, i32, i32) {
    %c0_i32 = arith.constant 0 : i32
    %c0_i32_0 = arith.constant 0 : i32
    return %arg0, %c0_i32, %arg1 : i32, i32, i32
  }
  func.func @transform_1(%arg0: i32, %arg1: i32) -> (i32, i32, i32) {
    %c0_i32 = arith.constant 0 : i32
    %c0_i32_0 = arith.constant 0 : i32
    %c0_i32_1 = arith.constant 0 : i32
    return %arg0, %c0_i32, %c0_i32_0 : i32, i32, i32
  }
  func.func @transform_2(%arg0: i32, %arg1: i32) -> (i32, i32, i32) {
    %c0_i32 = arith.constant 0 : i32
    %c0_i32_0 = arith.constant 0 : i32
    %c0_i32_1 = arith.constant 0 : i32
    return %arg0, %c0_i32, %c0_i32_0 : i32, i32, i32
  }
  func.func @transform_3(%arg0: i32, %arg1: i32) -> (i32, i32) {
    %c0_i32 = arith.constant 0 : i32
    %c0_i32_0 = arith.constant 0 : i32
    %c0_i32_1 = arith.constant 0 : i32
    return %c0_i32, %c0_i32_0 : i32, i32
  }
  func.func @transform_4(%arg0: i32, %arg1: i32) -> (i32, i32) {
    %c0_i32 = arith.constant 0 : i32
    %c0_i32_0 = arith.constant 0 : i32
    %c0_i32_1 = arith.constant 0 : i32
    return %c0_i32, %c0_i32_0 : i32, i32
  }
  func.func @transform_5(%arg0: i32, %arg1: i32) -> (i32, i32) {
    %c0_i32 = arith.constant 0 : i32
    %c0_i32_0 = arith.constant 0 : i32
    %c0_i32_1 = arith.constant 0 : i32
    return %c0_i32, %c0_i32_0 : i32, i32
  }
  func.func @transform_6(%arg0: i32, %arg1: i32) -> (i32, i32) {
    %c0_i32 = arith.constant 0 : i32
    %c0_i32_0 = arith.constant 0 : i32
    %c0_i32_1 = arith.constant 0 : i32
    return %c0_i32, %c0_i32_0 : i32, i32
  }
  func.func @transform_7(%arg0: i32, %arg1: i32) -> (i32, i32, i32) {
    %c0_i32 = arith.constant 0 : i32
    %c0_i32_0 = arith.constant 0 : i32
    return %arg0, %c0_i32, %arg1 : i32, i32, i32
  }
  func.func @transform_8(%arg0: i32, %arg1: i32) -> (i32, i32, i32, i32) {
    %c0_i32 = arith.constant 0 : i32
    %c0_i32_0 = arith.constant 0 : i32
    %c0_i32_1 = arith.constant 0 : i32
    return %arg0, %c0_i32, %arg1, %c0_i32_0 : i32, i32, i32, i32
  }
}

</mosaic_0001>

<llo_original>
// kernel: tpu_custom_call.1
$region0: #{tpu_custom_call.1}
  #allocation0 [shape = 'u32[]', space=smem, size = 0x4, offset = 0x4, fixed_abs, tag = 'smem constant byte address 0x4 - core index']
  #allocation1 [shape = 'u32[72,128]{1,0:T(1,128)}', space=vmem, size = 0x9000, scoped, tag = 'internal scratch']
  %s0 = inlined_call_operand.vmem [shape: bf16[2,32,128], index: 0, kind: input, shape index: {}]
  %s1 = inlined_call_operand.vmem [shape: bf16[2,32,128], index: 1, kind: input, shape index: {}]
  %s2 = inlined_call_operand.hbm [shape: bf16[2,32,128], index: 2, kind: input, shape index: {}]
  %s3 = inlined_call_operand.hbm [shape: bf16[32,32], index: 3, kind: input, shape index: {}]
  %s4 = inlined_call_operand.vmem [shape: f32[32,1], index: 4, kind: input, shape index: {}]
  %s5 = inlined_call_operand.hbm [shape: bf16[32,32], index: 5, kind: input, shape index: {}]
  %s6 = inlined_call_operand.vmem [shape: f32[32,1], index: 6, kind: input, shape index: {}]
  %s7 = inlined_call_operand.hbm [shape: f32[2,32,128], index: 7, kind: output, shape index: {0}]
  %s8 = inlined_call_operand.hbm [shape: bf16[2,4,128,128], index: 8, kind: output, shape index: {1}]
  %9 = xla_tuple %s7, %s8
  %s10 = sld [smem:[#allocation0]]
  $region81: #{tpu_custom_call.1} parent=0
    _
  %s12 = ssub.s32 1, %s10
  %s13 = scalar_select 0, %s12, %s10
  $region1: #{tpu_custom_call.1} parent=0
    #allocation2 [shape = 'u8[8192]{0}', space=vmem, size = 0x2000, scoped, tag = 'input window, operand 2, single buffered']
    #allocation3 [shape = 's32[2]{0}', space=sflag, size = 0x8, scoped, tag = 'scoped memory for tpu_custom_call.1']
    #allocation4 [shape = 's32[2]{0}', space=sflag, size = 0x8, scoped, tag = 'scoped memory for tpu_custom_call.1']
    #allocation5 [shape = 'u8[8192]{0}', space=vmem, size = 0x2000, scoped, tag = 'input window, operand 3, single buffered']
    #allocation6 [shape = 's32[1]{0}', space=sflag, size = 0x4, scoped, tag = 'scoped memory for tpu_custom_call.1']
    #allocation7 [shape = 'u8[8192]{0}', space=vmem, size = 0x2000, scoped, tag = 'input window, operand 5, single buffered']
    #allocation8 [shape = 'u8[32768]{0}', space=vmem, size = 0x8000, scoped, tag = 'output window, operand 0']
    #allocation9 [shape = 'u8[262144]{0}', space=vmem, size = 0x40000, scoped, tag = 'output window, operand 1']
    #allocation10 [shape = 's32[2]{0}', space=sflag, size = 0x8, scoped, tag = 'scoped memory for tpu_custom_call.1']
    %14 = vsyncpa [#allocation3], 0
    %15 = vsyncpa [#allocation6], 0
    %16 = vsyncpa [#allocation4], 0
    %s17 = scalar_lea.sflag [#allocation4], 1
    %18 = vsyncpa %s17, 0
    %19 = vsyncpa [#allocation10], 0
    %s20 = scalar_lea.sflag [#allocation10], 1
    %21 = vsyncpa %s20, 0
    loop: start=0, step=1, limit=4
    $region2: #{tpu_custom_call.1} parent=1 // loop_pre_header
      _
    $region3: #{tpu_custom_call.1} parent=1 // loop_header
      %s23 = sphi 0, %s27
      %p24 = scmp.ge.s32.totalorder %s23, 4
      %s30 = sphi 0, %s42
      %s31 = sphi 0, %s38
      %s32 = sphi 0, %s30
      %s33 = sphi 0, %s31
      %s34 = sphi 0, %s32
      %s35 = sphi 0, %s33
      %s47 = sphi 0, %s49
      %s50 = sphi 0, %s47
      %s51 = sphi 0, %s50
      %s67 = sphi 0, %s51
      %s73 = sphi 0, %s75
      %s76 = sphi 0, %s73
      %s77 = sphi 0, %s76
      %s93 = sphi 0, %s77
      %s99 = sphi 0, %s101
      %s102 = sphi 0, %s99
      %s103 = sphi 0, %s102
      %s119 = sphi 0, %s103
      %s123 = sphi 0, %s123
      %s125 = sphi 0, %s123
      %s126 = sphi 0, %s125
      %s140 = sphi 0, %s126
      %s144 = sphi 0, %s144
      %s146 = sphi 0, %s144
      %s147 = sphi 0, %s146
      %s161 = sphi 0, %s147
      %s165 = sphi 0, %s165
      %s167 = sphi 0, %s165
      %s168 = sphi 0, %s167
      %s182 = sphi 0, %s168
      %s186 = sphi 0, %s186
      %s188 = sphi 0, %s186
      %s189 = sphi 0, %s188
      %s203 = sphi 0, %s189
      %s211 = sphi 0, %s213
      %s214 = sphi 0, %s211
      %s215 = sphi 0, %s214
      %s231 = sphi 0, %s215
      %s239 = sphi 0, %s241
      %s242 = sphi 0, %s239
      %s243 = sphi 0, %s242
      %s259 = sphi 0, %s243
    $region4: #{tpu_custom_call.1} parent=1 // loop_header_branch
      %26 = sbr.rel (%p24) target = $region8
    $region5: #{tpu_custom_call.1} parent=1 // loop_body
      %s28 = ssub.s32 %s23, 1
      %s29 = ssub.s32 %s23, 2
      %s36 = sadd.s32 1, %s31
      %p37 = scmp.ge.s32.totalorder %s36, 1
      %s38 = scalar_select %p37, 0, %s36
      %s39 = sadd.s32 1, %s30
      %s40 = scalar_select %p37, %s39, %s30
      %p41 = scmp.ge.s32.totalorder %s40, 2
      %s42 = scalar_select %p41, 0, %s40
      %s43 = ssub.s32 %s30, %s42
      %s44 = ssub.s32 %s31, %s38
      %s45 = sor.u32 %s43, %s44
      %p46 = scmp.eq.s32.totalorder %s45, 0
      %s48 = sadd.s32 %s47, 1
      %s49 = scalar_select %p46, %s47, %s48
      %p52 = pneg %p46
      %p53 = scmp.eq.s32.totalorder %s23, 1
      %p54 = por %p52, %p53
      %p55 = scmp.ne.s32.totalorder %s47, %s50
      %p56 = scmp.eq.s32.totalorder %s23, 0
      %p57 = por %p55, %p56
      %p58 = scmp.ne.s32.totalorder %s47, %s50
      %p59 = scmp.eq.s32.totalorder %s28, 1
      %p60 = por %p58, %p59
      %p61 = scmp.ne.s32.totalorder %s50, %s51
      %p62 = scmp.eq.s32.totalorder %s28, 0
      %p63 = por %p61, %p62
      %p64 = scmp.ne.s32.totalorder %s50, %s51
      %p65 = scmp.eq.s32.totalorder %s29, 1
      %p66 = por %p64, %p65
      %p68 = scmp.ne.s32.totalorder %s51, %s67
      %p69 = scmp.eq.s32.totalorder %s29, 0
      %p70 = por %p68, %p69
      %s71 = ssub.s32 %s30, %s42
      %p72 = scmp.eq.s32.totalorder %s71, 0
      %s74 = sadd.s32 %s73, 1
      %s75 = scalar_select %p72, %s73, %s74
      %p78 = pneg %p72
      %p79 = scmp.eq.s32.totalorder %s23, 1
      %p80 = por %p78, %p79
      %p81 = scmp.ne.s32.totalorder %s73, %s76
      %p82 = scmp.eq.s32.totalorder %s23, 0
      %p83 = por %p81, %p82
      %p84 = scmp.ne.s32.totalorder %s73, %s76
      %p85 = scmp.eq.s32.totalorder %s28, 1
      %p86 = por %p84, %p85
      %p87 = scmp.ne.s32.totalorder %s76, %s77
      %p88 = scmp.eq.s32.totalorder %s28, 0
      %p89 = por %p87, %p88
      %p90 = scmp.ne.s32.totalorder %s76, %s77
      %p91 = scmp.eq.s32.totalorder %s29, 1
      %p92 = por %p90, %p91
      %p94 = scmp.ne.s32.totalorder %s77, %s93
      %p95 = scmp.eq.s32.totalorder %s29, 0
      %p96 = por %p94, %p95
      %s97 = ssub.s32 %s30, %s42
      %p98 = scmp.eq.s32.totalorder %s97, 0
      %s100 = sadd.s32 %s99, 1
      %s101 = scalar_select %p98, %s99, %s100
      %p104 = pneg %p98
      %p105 = scmp.eq.s32.totalorder %s23, 1
      %p106 = por %p104, %p105
      %p107 = scmp.ne.s32.totalorder %s99, %s102
      %p108 = scmp.eq.s32.totalorder %s23, 0
      %p109 = por %p107, %p108
      %p110 = scmp.ne.s32.totalorder %s99, %s102
      %p111 = scmp.eq.s32.totalorder %s28, 1
      %p112 = por %p110, %p111
      %p113 = scmp.ne.s32.totalorder %s102, %s103
      %p114 = scmp.eq.s32.totalorder %s28, 0
      %p115 = por %p113, %p114
      %p116 = scmp.ne.s32.totalorder %s102, %s103
      %p117 = scmp.eq.s32.totalorder %s29, 1
      %p118 = por %p116, %p117
      %p120 = scmp.ne.s32.totalorder %s103, %s119
      %p121 = scmp.eq.s32.totalorder %s29, 0
      %p122 = por %p120, %p121
      %s124 = sadd.s32 %s123, 1
      %p127 = scmp.eq.s32.totalorder %s23, 1
      %p128 = scmp.ne.s32.totalorder %s123, %s125
      %p129 = scmp.eq.s32.totalorder %s23, 0
      %p130 = por %p128, %p129
      %p131 = scmp.ne.s32.totalorder %s123, %s125
      %p132 = scmp.eq.s32.totalorder %s28, 1
      %p133 = por %p131, %p132
      %p134 = scmp.ne.s32.totalorder %s125, %s126
      %p135 = scmp.eq.s32.totalorder %s28, 0
      %p136 = por %p134, %p135
      %p137 = scmp.ne.s32.totalorder %s125, %s126
      %p138 = scmp.eq.s32.totalorder %s29, 1
      %p139 = por %p137, %p138
      %p141 = scmp.ne.s32.totalorder %s126, %s140
      %p142 = scmp.eq.s32.totalorder %s29, 0
      %p143 = por %p141, %p142
      %s145 = sadd.s32 %s144, 1
      %p148 = scmp.eq.s32.totalorder %s23, 1
      %p149 = scmp.ne.s32.totalorder %s144, %s146
      %p150 = scmp.eq.s32.totalorder %s23, 0
      %p151 = por %p149, %p150
      %p152 = scmp.ne.s32.totalorder %s144, %s146
      %p153 = scmp.eq.s32.totalorder %s28, 1
      %p154 = por %p152, %p153
      %p155 = scmp.ne.s32.totalorder %s146, %s147
      %p156 = scmp.eq.s32.totalorder %s28, 0
      %p157 = por %p155, %p156
      %p158 = scmp.ne.s32.totalorder %s146, %s147
      %p159 = scmp.eq.s32.totalorder %s29, 1
      %p160 = por %p158, %p159
      %p162 = scmp.ne.s32.totalorder %s147, %s161
      %p163 = scmp.eq.s32.totalorder %s29, 0
      %p164 = por %p162, %p163
      %s166 = sadd.s32 %s165, 1
      %p169 = scmp.eq.s32.totalorder %s23, 1
      %p170 = scmp.ne.s32.totalorder %s165, %s167
      %p171 = scmp.eq.s32.totalorder %s23, 0
      %p172 = por %p170, %p171
      %p173 = scmp.ne.s32.totalorder %s165, %s167
      %p174 = scmp.eq.s32.totalorder %s28, 1
      %p175 = por %p173, %p174
      %p176 = scmp.ne.s32.totalorder %s167, %s168
      %p177 = scmp.eq.s32.totalorder %s28, 0
      %p178 = por %p176, %p177
      %p179 = scmp.ne.s32.totalorder %s167, %s168
      %p180 = scmp.eq.s32.totalorder %s29, 1
      %p181 = por %p179, %p180
      %p183 = scmp.ne.s32.totalorder %s168, %s182
      %p184 = scmp.eq.s32.totalorder %s29, 0
      %p185 = por %p183, %p184
      %s187 = sadd.s32 %s186, 1
      %p190 = scmp.eq.s32.totalorder %s23, 1
      %p191 = scmp.ne.s32.totalorder %s186, %s188
      %p192 = scmp.eq.s32.totalorder %s23, 0
      %p193 = por %p191, %p192
      %p194 = scmp.ne.s32.totalorder %s186, %s188
      %p195 = scmp.eq.s32.totalorder %s28, 1
      %p196 = por %p194, %p195
      %p197 = scmp.ne.s32.totalorder %s188, %s189
      %p198 = scmp.eq.s32.totalorder %s28, 0
      %p199 = por %p197, %p198
      %p200 = scmp.ne.s32.totalorder %s188, %s189
      %p201 = scmp.eq.s32.totalorder %s29, 1
      %p202 = por %p200, %p201
      %p204 = scmp.ne.s32.totalorder %s189, %s203
      %p205 = scmp.eq.s32.totalorder %s29, 0
      %p206 = por %p204, %p205
      %s207 = ssub.s32 %s30, %s42
      %s208 = ssub.s32 %s31, %s38
      %s209 = sor.u32 %s207, %s208
      %p210 = scmp.eq.s32.totalorder %s209, 0
      %s212 = sadd.s32 %s211, 1
      %s213 = scalar_select %p210, %s211, %s212
      %p216 = pneg %p210
      %p217 = scmp.eq.s32.totalorder %s23, 1
      %p218 = por %p216, %p217
      %p219 = scmp.ne.s32.totalorder %s211, %s214
      %p220 = scmp.eq.s32.totalorder %s23, 0
      %p221 = por %p219, %p220
      %p222 = scmp.ne.s32.totalorder %s211, %s214
      %p223 = scmp.eq.s32.totalorder %s28, 1
      %p224 = por %p222, %p223
      %p225 = scmp.ne.s32.totalorder %s214, %s215
      %p226 = scmp.eq.s32.totalorder %s28, 0
      %p227 = por %p225, %p226
      %p228 = scmp.ne.s32.totalorder %s214, %s215
      %p229 = scmp.eq.s32.totalorder %s29, 1
      %p230 = por %p228, %p229
      %p232 = scmp.ne.s32.totalorder %s215, %s231
      %p233 = scmp.eq.s32.totalorder %s29, 0
      %p234 = por %p232, %p233
      %s235 = ssub.s32 %s30, %s42
      %s236 = ssub.s32 %s31, %s38
      %s237 = sor.u32 %s235, %s236
      %p238 = scmp.eq.s32.totalorder %s237, 0
      %s240 = sadd.s32 %s239, 1
      %s241 = scalar_select %p238, %s239, %s240
      %p244 = pneg %p238
      %p245 = scmp.eq.s32.totalorder %s23, 1
      %p246 = por %p244, %p245
      %p247 = scmp.ne.s32.totalorder %s239, %s242
      %p248 = scmp.eq.s32.totalorder %s23, 0
      %p249 = por %p247, %p248
      %p250 = scmp.ne.s32.totalorder %s239, %s242
      %p251 = scmp.eq.s32.totalorder %s28, 1
      %p252 = por %p250, %p251
      %p253 = scmp.ne.s32.totalorder %s242, %s243
      %p254 = scmp.eq.s32.totalorder %s28, 0
      %p255 = por %p253, %p254
      %p256 = scmp.ne.s32.totalorder %s242, %s243
      %p257 = scmp.eq.s32.totalorder %s29, 1
      %p258 = por %p256, %p257
      %p260 = scmp.ne.s32.totalorder %s243, %s259
      %p261 = scmp.eq.s32.totalorder %s29, 0
      %p262 = por %p260, %p261
      %p263 = scmp.le.s32.totalorder 1, %s23
      %p264 = scmp.lt.s32.totalorder %s23, 3
      %p265 = pnand %p263, %p264
      %p266 = pneg %p265
      // Predicated region
      $region9: #{tpu_custom_call.1} parent=5 // pred_check
        _
      $region10: #{tpu_custom_call.1} parent=5 // pred_check_branch
        %268 = sbr.rel (%p265) target = $region12
      $region11: #{tpu_custom_call.1} parent=5 // pred_region
        %s269 = ssub.s32 %s23, 1
        // Predicated region
        $region13: #{tpu_custom_call.1} parent=11 // pred_check
          %p270 = pneg %p89
        $region14: #{tpu_custom_call.1} parent=11 // pred_check_branch
          %272 = sbr.rel (%p270) target = $region16
        $region15: #{tpu_custom_call.1} parent=11 // pred_region
          %p273 = scmp.lt.s32.totalorder %s32, 1
          %s274 = scalar_select %p273, %s32, 1
          %s275 = smul.addr %s274, 4
          %s276 = smul.addr %s275, 4
          %s277 = scalar_lea.vmem %s1, %s276
        $region16: #{tpu_custom_call.1} parent=11 // pred_fallthru
          _
        // Predicated region
        $region17: #{tpu_custom_call.1} parent=11 // pred_check
          %p278 = pneg %p115
        $region18: #{tpu_custom_call.1} parent=11 // pred_check_branch
          %280 = sbr.rel (%p278) target = $region20
        $region19: #{tpu_custom_call.1} parent=11 // pred_region
          %282 = vsyncadd [#allocation3], 0
          %s283 = smul.addr %s32, 4
          %s284 = smul.addr %s283, 4
          %s285 = scalar_lea.hbm %s2, %s284
          %s286 = sshll.u32 %s285, 4
          %s287 = int_to_ptr.hbm [resolvable:$true] %s286
          %s288 = sshll.u32 [#allocation2], 4
          %s289 = int_to_ptr.vmem [resolvable:$true] %s288
          %294 = dma.hbm_to_vmem [thread:$0]  %s287, 256, %s289, [#allocation3], 64, 64, 4
        $region20: #{tpu_custom_call.1} parent=11 // pred_fallthru
          _
        // Predicated region
        $region21: #{tpu_custom_call.1} parent=11 // pred_check
          %p295 = pneg %p136
        $region22: #{tpu_custom_call.1} parent=11 // pred_check_branch
          %297 = sbr.rel (%p295) target = $region24
        $region23: #{tpu_custom_call.1} parent=11 // pred_region
          %299 = vsyncadd [#allocation6], 0
          %s300 = sshll.u32 %s3, 4
          %s301 = int_to_ptr.hbm [resolvable:$true] %s300
          %s302 = sshll.u32 [#allocation5], 4
          %s303 = int_to_ptr.vmem [resolvable:$true] %s302
          %308 = dma.hbm_to_vmem [thread:$0]  %s301, 256, %s303, [#allocation6], 64, 64, 4
        $region24: #{tpu_custom_call.1} parent=11 // pred_fallthru
          _
        // Predicated region
        $region25: #{tpu_custom_call.1} parent=11 // pred_check
          %p309 = pneg %p157
        $region26: #{tpu_custom_call.1} parent=11 // pred_check_branch
          %311 = sbr.rel (%p309) target = $region28
        $region27: #{tpu_custom_call.1} parent=11 // pred_region
          _
        $region28: #{tpu_custom_call.1} parent=11 // pred_fallthru
          _
        // Predicated region
        $region29: #{tpu_custom_call.1} parent=11 // pred_check
          %p312 = pneg %p178
        $region30: #{tpu_custom_call.1} parent=11 // pred_check_branch
          %314 = sbr.rel (%p312) target = $region32
        $region31: #{tpu_custom_call.1} parent=11 // pred_region
          %316 = vsyncadd [#allocation6], 0
          %s317 = sshll.u32 %s5, 4
          %s318 = int_to_ptr.hbm [resolvable:$true] %s317
          %s319 = sshll.u32 [#allocation7], 4
          %s320 = int_to_ptr.vmem [resolvable:$true] %s319
          %325 = dma.hbm_to_vmem [thread:$0]  %s318, 256, %s320, [#allocation6], 64, 64, 4
        $region32: #{tpu_custom_call.1} parent=11 // pred_fallthru
          _
        // Predicated region
        $region33: #{tpu_custom_call.1} parent=11 // pred_check
          %p326 = pneg %p199
        $region34: #{tpu_custom_call.1} parent=11 // pred_check_branch
          %328 = sbr.rel (%p326) target = $region36
        $region35: #{tpu_custom_call.1} parent=11 // pred_region
          _
        $region36: #{tpu_custom_call.1} parent=11 // pred_fallthru
          _
      $region12: #{tpu_custom_call.1} parent=5 // pred_fallthru
        _
      %p329 = scmp.lt.s32.totalorder %s23, 2
      // Predicated region
      $region37: #{tpu_custom_call.1} parent=5 // pred_check
        %p330 = pneg %p329
      $region38: #{tpu_custom_call.1} parent=5 // pred_check_branch
        %332 = sbr.rel (%p330) target = $region40
      $region39: #{tpu_custom_call.1} parent=5 // pred_region
        // Predicated region
        $region41: #{tpu_custom_call.1} parent=39 // pred_check
          %p333 = pneg %p57
        $region42: #{tpu_custom_call.1} parent=39 // pred_check_branch
          %335 = sbr.rel (%p333) target = $region44
        $region43: #{tpu_custom_call.1} parent=39 // pred_region
          %p336 = scmp.lt.s32.totalorder %s30, 1
          %s337 = scalar_select %p336, %s30, 1
          %p338 = scmp.lt.s32.totalorder %s31, 0
          %s339 = scalar_select %p338, %s31, 0
          %s340 = smul.addr %s337, 4
          %s341 = sadd.s32 %s339, %s340
          %s342 = smul.addr %s341, 4
          %s343 = scalar_lea.vmem %s0, %s342
        $region44: #{tpu_custom_call.1} parent=39 // pred_fallthru
          _
      $region40: #{tpu_custom_call.1} parent=5 // pred_fallthru
        _
      %p344 = scmp.le.s32.totalorder 1, %s23
      %p345 = scmp.lt.s32.totalorder %s23, 3
      %p346 = pnand %p344, %p345
      %p347 = pneg %p346
      // Predicated region
      $region45: #{tpu_custom_call.1} parent=5 // pred_check
        _
      $region46: #{tpu_custom_call.1} parent=5 // pred_check_branch
        %349 = sbr.rel (%p346) target = $region48
      $region47: #{tpu_custom_call.1} parent=5 // pred_region
        %s350 = ssub.s32 %s23, 1
        // Predicated region
        $region49: #{tpu_custom_call.1} parent=47 // pred_check
          %p351 = pneg %p115
        $region50: #{tpu_custom_call.1} parent=47 // pred_check_branch
          %353 = sbr.rel (%p351) target = $region52
        $region51: #{tpu_custom_call.1} parent=47 // pred_region
          %355 = dma.done [#allocation3], 256
        $region52: #{tpu_custom_call.1} parent=47 // pred_fallthru
          _
        // Predicated region
        $region53: #{tpu_custom_call.1} parent=47 // pred_check
          %p356 = pneg %p136
        $region54: #{tpu_custom_call.1} parent=47 // pred_check_branch
          %358 = sbr.rel (%p356) target = $region56
        $region55: #{tpu_custom_call.1} parent=47 // pred_region
          %360 = dma.done [#allocation6], 256
        $region56: #{tpu_custom_call.1} parent=47 // pred_fallthru
          _
        // Predicated region
        $region57: #{tpu_custom_call.1} parent=47 // pred_check
          %p361 = pneg %p178
        $region58: #{tpu_custom_call.1} parent=47 // pred_check_branch
          %363 = sbr.rel (%p361) target = $region60
        $region59: #{tpu_custom_call.1} parent=47 // pred_region
          %365 = dma.done [#allocation6], 256
        $region60: #{tpu_custom_call.1} parent=47 // pred_fallthru
          _
        %p366 = scmp.lt.s32.totalorder %s32, 1
        %s367 = scalar_select %p366, %s32, 1
        %p368 = scmp.lt.s32.totalorder %s33, 0
        %s369 = scalar_select %p368, %s33, 0
        %s370 = smul.addr %s367, 4
        %s371 = sadd.s32 %s369, %s370
        %s372 = smul.addr %s371, 4
        %s373 = scalar_lea.vmem %s0, %s372
        %p374 = pneg %p63
        %p375 = pneg %p60
        %p376 = scmp.lt.s32.totalorder %s32, 1
        %s377 = scalar_select %p376, %s32, 1
        %s378 = smul.addr %s377, 4
        %s379 = smul.addr %s378, 4
        %s380 = scalar_lea.vmem %s1, %s379
        %p381 = pneg %p89
        %p382 = pneg %p86
        %p383 = pneg %p115
        %p384 = pneg %p112
        %p385 = pneg %p136
        %p386 = pneg %p133
        %p387 = pneg %p157
        %p388 = pneg %p154
        %p389 = pneg %p178
        %p390 = pneg %p175
        %p391 = pneg %p199
        %p392 = pneg %p196
        %p393 = pneg %p227
        %p394 = pneg %p224
        %s395 = sand.u32 %s214, 1
        %s396 = scalar_lea.sflag [#allocation4], %s395
        %s397 = sand.u32 %s214, 1
        %s398 = smul.addr %s397, 32
        %s399 = scalar_lea.vmem [#allocation8], %s398
        %p400 = pneg %p255
        %p401 = pneg %p252
        %s402 = sand.u32 %s242, 1
        %s403 = scalar_lea.sflag [#allocation10], %s402
        %s404 = sand.u32 %s242, 1
        %s405 = smul.addr %s404, 256
        %s406 = scalar_lea.vmem [#allocation9], %s405
        %p407 = scmp.lt.s32.totalorder %s32, 1
        %s408 = scalar_select %p407, %s32, 1
        %p409 = scmp.lt.s32.totalorder %s33, 0
        %s410 = scalar_select %p409, %s33, 0
        %s411 = smul.addr %s408, 4
        %s412 = sadd.s32 %s410, %s411
        %s413 = smul.addr %s412, 4
        %s414 = scalar_lea.vmem %s0, %s413
        %p415 = scmp.lt.s32.totalorder %s32, 1
        %s416 = scalar_select %p415, %s32, 1
        %s417 = smul.addr %s416, 4
        %s418 = smul.addr %s417, 4
        %s419 = scalar_lea.vmem %s1, %s418
        %s420 = smul.u32 16, %s33
        %v422 = vld [vmem:[#allocation5] sm:$0xf]
        %v423 = vld [vmem:[#allocation5 + $0x4] sm:$0xf]
        %v424 = vld [vmem:[#allocation5 + $0x8] sm:$0xf]
        %v425 = vld [vmem:[#allocation5 + $0xc] sm:$0xf]
        %v426 = vld [vmem:[%s414] sm:$0xf]
        %v427 = vld [vmem:[%s414 + $0x4] sm:$0xf]
        %v428 = vld [vmem:[%s414 + $0x8] sm:$0xf]
        %v429 = vld [vmem:[%s414 + $0xc] sm:$0xf]
        %v430 = vld [vmem:[%s4] sm:$0xff]
        %v431 = vld [vmem:[%s4 + $0x8] sm:$0xff]
        %v432 = vld [vmem:[%s4 + $0x10] sm:$0xff]
        %v433 = vld [vmem:[%s4 + $0x18] sm:$0xff]
        %435 = vset.pattern.permute.xlu0 0
        %436 = vperm.xlu0 %435, %v430
        %v437 = vpop.permute.xlu0 %436
        %440 = vset.pattern.permute.xlu0 0
        %441 = vperm.xlu0 %440, %v431
        %v442 = vpop.permute.xlu0 %441
        %445 = vset.pattern.permute.xlu0 0
        %446 = vperm.xlu0 %445, %v432
        %v447 = vpop.permute.xlu0 %446
        %450 = vset.pattern.permute.xlu0 0
        %451 = vperm.xlu0 %450, %v433
        %v452 = vpop.permute.xlu0 %451
        %v458 = vunpack.c.l.b16 %v422
        %v459 = vunpack.c.l.b16 %v423
        %v460 = vunpack.c.l.b16 %v424
        %v461 = vunpack.c.l.b16 %v425
        %v462 = vpack.c.b16 %v459, %v458
        %v463 = vpack.c.b16 %v461, %v460
        %v468 = vunpack.c.l.b16 %v426
        %v469 = vunpack.c.l.b16 %v427
        %v470 = vunpack.c.l.b16 %v428
        %v471 = vunpack.c.l.b16 %v429
        %v472 = vpack.c.b16 %v469, %v468
        %v473 = vpack.c.b16 %v471, %v470
        %vm476 = vcmask 261120
        %v478 = vsel %vm476, %v462, 0
        %v481 = vsel %vm476, %v463, 0
        %483 = vmatpush.bf16.msra.mxu0 0
        %484 = vmatpush.bf16.msra.mxu0 0
        %485 = vmatpush.bf16.msra.mxu0 0
        %486 = vmatpush.bf16.msra.mxu0 0
        %487 = vmatpush.bf16.msra.mxu0 0
        %488 = vmatpush.bf16.msra.mxu0 0
        %489 = vmatpush.bf16.msra.mxu0 %v473
        %490 = vmatpush.bf16.msra.mxu0 %v472
        %491 = vmatmul.bf16.gmra.mxu0 %v478
        %v492 = vpop.f32.mrf.mxu0
        %v493 = vadd.f32 %v437, %v492
        %v494 = vpop.f32.mrf.mxu0
        %v495 = vadd.f32 %v442, %v494
        %496 = vmatmul.bf16.gmra.mxu0 %v481
        %v497 = vpop.f32.mrf.mxu0
        %v498 = vadd.f32 %v447, %v497
        %v499 = vpop.f32.mrf.mxu0
        %v500 = vadd.f32 %v452, %v499
        %501 = vdwg.mxu0
        %v502 = vmul.f32 %v493, 0.17677669
        %v503 = vmul.f32 %v495, 0.17677669
        %v504 = vmul.f32 %v498, 0.17677669
        %v505 = vmul.f32 %v500, 0.17677669
        %v506 = vpack.c.bf16 %v502, %v502
        %v507 = vpack.c.bf16 %v503, %v503
        %v508 = vpack.c.bf16 %v504, %v504
        %v509 = vpack.c.bf16 %v505, %v505
        %v510 = vld [vmem:[%s419] sm:$0xf]
        %v511 = vld [vmem:[%s419 + $0x4] sm:$0xf]
        %v512 = vld [vmem:[%s419 + $0x8] sm:$0xf]
        %v513 = vld [vmem:[%s419 + $0xc] sm:$0xf]
        %v514 = vld [vmem:[#allocation2] sm:$0xf]
        %v515 = vld [vmem:[#allocation2 + $0x4] sm:$0xf]
        %v516 = vld [vmem:[#allocation2 + $0x8] sm:$0xf]
        %v517 = vld [vmem:[#allocation2 + $0xc] sm:$0xf]
        %518 = vxpose.xlu0.c.b16.start [1/8] %v506, 128
        %519 = vxpose.xlu0.c.b16.cont [2/8] 0, 128
        %520 = vxpose.xlu0.c.b16.cont [3/8] 0, 128
        %521 = vxpose.xlu0.c.b16.cont [4/8] 0, 128
        %522 = vxpose.xlu0.c.b16.cont [5/8] 0, 128
        %523 = vxpose.xlu0.c.b16.cont [6/8] 0, 128
        %524 = vxpose.xlu0.c.b16.cont [7/8] 0, 128
        %525 = vxpose.xlu0.c.b16.end [8/8] 0, 128
        %v526 = vpop.trf.xlu0
        %v527 = vpop.trf.xlu0
        %v528 = vpop.trf.xlu0
        %v529 = vpop.trf.xlu0
        %v530 = vpop.trf.xlu0
        %v531 = vpop.trf.xlu0
        %v532 = vpop.trf.xlu0
        %v533 = vpop.trf.xlu0
        %vm534 = vcmask 64512
        %v536 = vsel %vm534, %v526, 0
        %v539 = vsel %vm534, %v527, 0
        %v542 = vsel %vm534, %v528, 0
        %v545 = vsel %vm534, %v529, 0
        %v548 = vsel %vm534, %v530, 0
        %v551 = vsel %vm534, %v531, 0
        %v554 = vsel %vm534, %v532, 0
        %v557 = vsel %vm534, %v533, 0
        %vm559 = vcmask 1043456
        %v561 = vsel %vm559, %v510, 0
        %563 = vmatpush.bf16.msra.mxu0 0
        %564 = vmatpush.bf16.msra.mxu0 0
        %565 = vmatpush.bf16.msra.mxu0 0
        %566 = vmatpush.bf16.msra.mxu0 0
        %567 = vmatpush.bf16.msra.mxu0 0
        %568 = vmatpush.bf16.msra.mxu0 0
        %569 = vmatpush.bf16.msra.mxu0 0
        %570 = vmatpush.bf16.msra.mxu0 %v561
        %571 = vmatmul.bf16.gmra.mxu0 %v536
        %v572 = vpop.f32.mrf.mxu0
        %v573 = vadd.f32 0.0, %v572
        %v574 = vpop.f32.mrf.mxu0
        %v575 = vadd.f32 0.0, %v574
        %576 = vmatmul.bf16.gmra.mxu0 %v539
        %v577 = vpop.f32.mrf.mxu0
        %v578 = vadd.f32 0.0, %v577
        %v579 = vpop.f32.mrf.mxu0
        %v580 = vadd.f32 0.0, %v579
        %581 = vmatmul.bf16.gmra.mxu0 %v542
        %v582 = vpop.f32.mrf.mxu0
        %v583 = vadd.f32 0.0, %v582
        %v584 = vpop.f32.mrf.mxu0
        %v585 = vadd.f32 0.0, %v584
        %586 = vmatmul.bf16.gmra.mxu0 %v545
        %v587 = vpop.f32.mrf.mxu0
        %v588 = vadd.f32 0.0, %v587
        %v589 = vpop.f32.mrf.mxu0
        %v590 = vadd.f32 0.0, %v589
        %591 = vmatmul.bf16.gmra.mxu0 %v548
        %v592 = vpop.f32.mrf.mxu0
        %v593 = vadd.f32 0.0, %v592
        %v594 = vpop.f32.mrf.mxu0
        %v595 = vadd.f32 0.0, %v594
        %596 = vmatmul.bf16.gmra.mxu0 %v551
        %v597 = vpop.f32.mrf.mxu0
        %v598 = vadd.f32 0.0, %v597
        %v599 = vpop.f32.mrf.mxu0
        %v600 = vadd.f32 0.0, %v599
        %601 = vmatmul.bf16.gmra.mxu0 %v554
        %v602 = vpop.f32.mrf.mxu0
        %v603 = vadd.f32 0.0, %v602
        %v604 = vpop.f32.mrf.mxu0
        %v605 = vadd.f32 0.0, %v604
        %606 = vmatmul.bf16.gmra.mxu0 %v557
        %v607 = vpop.f32.mrf.mxu0
        %v608 = vadd.f32 0.0, %v607
        %v609 = vpop.f32.mrf.mxu0
        %v610 = vadd.f32 0.0, %v609
        %611 = vdwg.mxu0
        %612 = vxpose.xlu0.c.b16.start [1/8] %v507, 128
        %613 = vxpose.xlu0.c.b16.cont [2/8] 0, 128
        %614 = vxpose.xlu0.c.b16.cont [3/8] 0, 128
        %615 = vxpose.xlu0.c.b16.cont [4/8] 0, 128
        %616 = vxpose.xlu0.c.b16.cont [5/8] 0, 128
        %617 = vxpose.xlu0.c.b16.cont [6/8] 0, 128
        %618 = vxpose.xlu0.c.b16.cont [7/8] 0, 128
        %619 = vxpose.xlu0.c.b16.end [8/8] 0, 128
        %v620 = vpop.trf.xlu0
        %v621 = vpop.trf.xlu0
        %v622 = vpop.trf.xlu0
        %v623 = vpop.trf.xlu0
        %v624 = vpop.trf.xlu0
        %v625 = vpop.trf.xlu0
        %v626 = vpop.trf.xlu0
        %v627 = vpop.trf.xlu0
        %v629 = vsel %vm534, %v620, 0
        %v632 = vsel %vm534, %v621, 0
        %v635 = vsel %vm534, %v622, 0
        %v638 = vsel %vm534, %v623, 0
        %v641 = vsel %vm534, %v624, 0
        %v644 = vsel %vm534, %v625, 0
        %v647 = vsel %vm534, %v626, 0
        %v650 = vsel %vm534, %v627, 0
        %v653 = vsel %vm559, %v511, 0
        %655 = vmatpush.bf16.msra.mxu0 0
        %656 = vmatpush.bf16.msra.mxu0 0
        %657 = vmatpush.bf16.msra.mxu0 0
        %658 = vmatpush.bf16.msra.mxu0 0
        %659 = vmatpush.bf16.msra.mxu0 0
        %660 = vmatpush.bf16.msra.mxu0 0
        %661 = vmatpush.bf16.msra.mxu0 0
        %662 = vmatpush.bf16.msra.mxu0 %v653
        %663 = vmatmul.bf16.gmra.mxu0 %v629
        %v664 = vpop.f32.mrf.mxu0
        %v665 = vadd.f32 0.0, %v664
        %v666 = vpop.f32.mrf.mxu0
        %v667 = vadd.f32 0.0, %v666
        %668 = vmatmul.bf16.gmra.mxu0 %v632
        %v669 = vpop.f32.mrf.mxu0
        %v670 = vadd.f32 0.0, %v669
        %v671 = vpop.f32.mrf.mxu0
        %v672 = vadd.f32 0.0, %v671
        %673 = vmatmul.bf16.gmra.mxu0 %v635
        %v674 = vpop.f32.mrf.mxu0
        %v675 = vadd.f32 0.0, %v674
        %v676 = vpop.f32.mrf.mxu0
        %v677 = vadd.f32 0.0, %v676
        %678 = vmatmul.bf16.gmra.mxu0 %v638
        %v679 = vpop.f32.mrf.mxu0
        %v680 = vadd.f32 0.0, %v679
        %v681 = vpop.f32.mrf.mxu0
        %v682 = vadd.f32 0.0, %v681
        %683 = vmatmul.bf16.gmra.mxu0 %v641
        %v684 = vpop.f32.mrf.mxu0
        %v685 = vadd.f32 0.0, %v684
        %v686 = vpop.f32.mrf.mxu0
        %v687 = vadd.f32 0.0, %v686
        %688 = vmatmul.bf16.gmra.mxu0 %v644
        %v689 = vpop.f32.mrf.mxu0
        %v690 = vadd.f32 0.0, %v689
        %v691 = vpop.f32.mrf.mxu0
        %v692 = vadd.f32 0.0, %v691
        %693 = vmatmul.bf16.gmra.mxu0 %v647
        %v694 = vpop.f32.mrf.mxu0
        %v695 = vadd.f32 0.0, %v694
        %v696 = vpop.f32.mrf.mxu0
        %v697 = vadd.f32 0.0, %v696
        %698 = vmatmul.bf16.gmra.mxu0 %v650
        %v699 = vpop.f32.mrf.mxu0
        %v700 = vadd.f32 0.0, %v699
        %v701 = vpop.f32.mrf.mxu0
        %v702 = vadd.f32 0.0, %v701
        %703 = vdwg.mxu0
        %704 = vxpose.xlu0.c.b16.start [1/8] %v508, 128
        %705 = vxpose.xlu0.c.b16.cont [2/8] 0, 128
        %706 = vxpose.xlu0.c.b16.cont [3/8] 0, 128
        %707 = vxpose.xlu0.c.b16.cont [4/8] 0, 128
        %708 = vxpose.xlu0.c.b16.cont [5/8] 0, 128
        %709 = vxpose.xlu0.c.b16.cont [6/8] 0, 128
        %710 = vxpose.xlu0.c.b16.cont [7/8] 0, 128
        %711 = vxpose.xlu0.c.b16.end [8/8] 0, 128
        %v712 = vpop.trf.xlu0
        %v713 = vpop.trf.xlu0
        %v714 = vpop.trf.xlu0
        %v715 = vpop.trf.xlu0
        %v716 = vpop.trf.xlu0
        %v717 = vpop.trf.xlu0
        %v718 = vpop.trf.xlu0
        %v719 = vpop.trf.xlu0
        %v721 = vsel %vm534, %v712, 0
        %v724 = vsel %vm534, %v713, 0
        %v727 = vsel %vm534, %v714, 0
        %v730 = vsel %vm534, %v715, 0
        %v733 = vsel %vm534, %v716, 0
        %v736 = vsel %vm534, %v717, 0
        %v739 = vsel %vm534, %v718, 0
        %v742 = vsel %vm534, %v719, 0
        %v745 = vsel %vm559, %v512, 0
        %747 = vmatpush.bf16.msra.mxu0 0
        %748 = vmatpush.bf16.msra.mxu0 0
        %749 = vmatpush.bf16.msra.mxu0 0
        %750 = vmatpush.bf16.msra.mxu0 0
        %751 = vmatpush.bf16.msra.mxu0 0
        %752 = vmatpush.bf16.msra.mxu0 0
        %753 = vmatpush.bf16.msra.mxu0 0
        %754 = vmatpush.bf16.msra.mxu0 %v745
        %755 = vmatmul.bf16.gmra.mxu0 %v721
        %v756 = vpop.f32.mrf.mxu0
        %v757 = vadd.f32 0.0, %v756
        %v758 = vpop.f32.mrf.mxu0
        %v759 = vadd.f32 0.0, %v758
        %760 = vmatmul.bf16.gmra.mxu0 %v724
        %v761 = vpop.f32.mrf.mxu0
        %v762 = vadd.f32 0.0, %v761
        %v763 = vpop.f32.mrf.mxu0
        %v764 = vadd.f32 0.0, %v763
        %765 = vmatmul.bf16.gmra.mxu0 %v727
        %v766 = vpop.f32.mrf.mxu0
        %v767 = vadd.f32 0.0, %v766
        %v768 = vpop.f32.mrf.mxu0
        %v769 = vadd.f32 0.0, %v768
        %770 = vmatmul.bf16.gmra.mxu0 %v730
        %v771 = vpop.f32.mrf.mxu0
        %v772 = vadd.f32 0.0, %v771
        %v773 = vpop.f32.mrf.mxu0
        %v774 = vadd.f32 0.0, %v773
        %775 = vmatmul.bf16.gmra.mxu0 %v733
        %v776 = vpop.f32.mrf.mxu0
        %v777 = vadd.f32 0.0, %v776
        %v778 = vpop.f32.mrf.mxu0
        %v779 = vadd.f32 0.0, %v778
        %780 = vmatmul.bf16.gmra.mxu0 %v736
        %v781 = vpop.f32.mrf.mxu0
        %v782 = vadd.f32 0.0, %v781
        %v783 = vpop.f32.mrf.mxu0
        %v784 = vadd.f32 0.0, %v783
        %785 = vmatmul.bf16.gmra.mxu0 %v739
        %v786 = vpop.f32.mrf.mxu0
        %v787 = vadd.f32 0.0, %v786
        %v788 = vpop.f32.mrf.mxu0
        %v789 = vadd.f32 0.0, %v788
        %790 = vmatmul.bf16.gmra.mxu0 %v742
        %v791 = vpop.f32.mrf.mxu0
        %v792 = vadd.f32 0.0, %v791
        %v793 = vpop.f32.mrf.mxu0
        %v794 = vadd.f32 0.0, %v793
        %795 = vdwg.mxu0
        %796 = vxpose.xlu0.c.b16.start [1/8] %v509, 128
        %797 = vxpose.xlu0.c.b16.cont [2/8] 0, 128
        %798 = vxpose.xlu0.c.b16.cont [3/8] 0, 128
        %799 = vxpose.xlu0.c.b16.cont [4/8] 0, 128
        %800 = vxpose.xlu0.c.b16.cont [5/8] 0, 128
        %801 = vxpose.xlu0.c.b16.cont [6/8] 0, 128
        %802 = vxpose.xlu0.c.b16.cont [7/8] 0, 128
        %803 = vxpose.xlu0.c.b16.end [8/8] 0, 128
        %v804 = vpop.trf.xlu0
        %v805 = vpop.trf.xlu0
        %v806 = vpop.trf.xlu0
        %v807 = vpop.trf.xlu0
        %v808 = vpop.trf.xlu0
        %v809 = vpop.trf.xlu0
        %v810 = vpop.trf.xlu0
        %v811 = vpop.trf.xlu0
        %v813 = vsel %vm534, %v804, 0
        %v816 = vsel %vm534, %v805, 0
        %v819 = vsel %vm534, %v806, 0
        %v822 = vsel %vm534, %v807, 0
        %v825 = vsel %vm534, %v808, 0
        %v828 = vsel %vm534, %v809, 0
        %v831 = vsel %vm534, %v810, 0
        %v834 = vsel %vm534, %v811, 0
        %v837 = vsel %vm559, %v513, 0
        %839 = vmatpush.bf16.msra.mxu0 0
        %840 = vmatpush.bf16.msra.mxu0 0
        %841 = vmatpush.bf16.msra.mxu0 0
        %842 = vmatpush.bf16.msra.mxu0 0
        %843 = vmatpush.bf16.msra.mxu0 0
        %844 = vmatpush.bf16.msra.mxu0 0
        %845 = vmatpush.bf16.msra.mxu0 0
        %846 = vmatpush.bf16.msra.mxu0 %v837
        %847 = vmatmul.bf16.gmra.mxu0 %v813
        %v848 = vpop.f32.mrf.mxu0
        %v849 = vadd.f32 0.0, %v848
        %v850 = vpop.f32.mrf.mxu0
        %v851 = vadd.f32 0.0, %v850
        %852 = vmatmul.bf16.gmra.mxu0 %v816
        %v853 = vpop.f32.mrf.mxu0
        %v854 = vadd.f32 0.0, %v853
        %v855 = vpop.f32.mrf.mxu0
        %v856 = vadd.f32 0.0, %v855
        %857 = vmatmul.bf16.gmra.mxu0 %v819
        %v858 = vpop.f32.mrf.mxu0
        %v859 = vadd.f32 0.0, %v858
        %v860 = vpop.f32.mrf.mxu0
        %v861 = vadd.f32 0.0, %v860
        %862 = vmatmul.bf16.gmra.mxu0 %v822
        %v863 = vpop.f32.mrf.mxu0
        %v864 = vadd.f32 0.0, %v863
        %v865 = vpop.f32.mrf.mxu0
        %v866 = vadd.f32 0.0, %v865
        %867 = vmatmul.bf16.gmra.mxu0 %v825
        %v868 = vpop.f32.mrf.mxu0
        %v869 = vadd.f32 0.0, %v868
        %v870 = vpop.f32.mrf.mxu0
        %v871 = vadd.f32 0.0, %v870
        %872 = vmatmul.bf16.gmra.mxu0 %v828
        %v873 = vpop.f32.mrf.mxu0
        %v874 = vadd.f32 0.0, %v873
        %v875 = vpop.f32.mrf.mxu0
        %v876 = vadd.f32 0.0, %v875
        %877 = vmatmul.bf16.gmra.mxu0 %v831
        %v878 = vpop.f32.mrf.mxu0
        %v879 = vadd.f32 0.0, %v878
        %v880 = vpop.f32.mrf.mxu0
        %v881 = vadd.f32 0.0, %v880
        %882 = vmatmul.bf16.gmra.mxu0 %v834
        %v883 = vpop.f32.mrf.mxu0
        %v884 = vadd.f32 0.0, %v883
        %v885 = vpop.f32.mrf.mxu0
        %v886 = vadd.f32 0.0, %v885
        %887 = vdwg.mxu0
        %v888 = vpack.c.bf16 %v573, %v573
        %v889 = vpack.c.bf16 %v575, %v575
        %v890 = vpack.c.bf16 %v578, %v578
        %v891 = vpack.c.bf16 %v580, %v580
        %v892 = vpack.c.bf16 %v583, %v583
        %v893 = vpack.c.bf16 %v585, %v585
        %v894 = vpack.c.bf16 %v588, %v588
        %v895 = vpack.c.bf16 %v590, %v590
        %v896 = vpack.c.bf16 %v593, %v593
        %v897 = vpack.c.bf16 %v595, %v595
        %v898 = vpack.c.bf16 %v598, %v598
        %v899 = vpack.c.bf16 %v600, %v600
        %v900 = vpack.c.bf16 %v603, %v603
        %v901 = vpack.c.bf16 %v605, %v605
        %v902 = vpack.c.bf16 %v608, %v608
        %v903 = vpack.c.bf16 %v610, %v610
        %v904 = vpack.c.bf16 %v665, %v665
        %v905 = vpack.c.bf16 %v667, %v667
        %v906 = vpack.c.bf16 %v670, %v670
        %v907 = vpack.c.bf16 %v672, %v672
        %v908 = vpack.c.bf16 %v675, %v675
        %v909 = vpack.c.bf16 %v677, %v677
        %v910 = vpack.c.bf16 %v680, %v680
        %v911 = vpack.c.bf16 %v682, %v682
        %v912 = vpack.c.bf16 %v685, %v685
        %v913 = vpack.c.bf16 %v687, %v687
        %v914 = vpack.c.bf16 %v690, %v690
        %v915 = vpack.c.bf16 %v692, %v692
        %v916 = vpack.c.bf16 %v695, %v695
        %v917 = vpack.c.bf16 %v697, %v697
        %v918 = vpack.c.bf16 %v700, %v700
        %v919 = vpack.c.bf16 %v702, %v702
        %v920 = vpack.c.bf16 %v757, %v757
        %v921 = vpack.c.bf16 %v759, %v759
        %v922 = vpack.c.bf16 %v762, %v762
        %v923 = vpack.c.bf16 %v764, %v764
        %v924 = vpack.c.bf16 %v767, %v767
        %v925 = vpack.c.bf16 %v769, %v769
        %v926 = vpack.c.bf16 %v772, %v772
        %v927 = vpack.c.bf16 %v774, %v774
        %v928 = vpack.c.bf16 %v777, %v777
        %v929 = vpack.c.bf16 %v779, %v779
        %v930 = vpack.c.bf16 %v782, %v782
        %v931 = vpack.c.bf16 %v784, %v784
        %v932 = vpack.c.bf16 %v787, %v787
        %v933 = vpack.c.bf16 %v789, %v789
        %v934 = vpack.c.bf16 %v792, %v792
        %v935 = vpack.c.bf16 %v794, %v794
        %v936 = vpack.c.bf16 %v849, %v849
        %v937 = vpack.c.bf16 %v851, %v851
        %v938 = vpack.c.bf16 %v854, %v854
        %v939 = vpack.c.bf16 %v856, %v856
        %v940 = vpack.c.bf16 %v859, %v859
        %v941 = vpack.c.bf16 %v861, %v861
        %v942 = vpack.c.bf16 %v864, %v864
        %v943 = vpack.c.bf16 %v866, %v866
        %v944 = vpack.c.bf16 %v869, %v869
        %v945 = vpack.c.bf16 %v871, %v871
        %v946 = vpack.c.bf16 %v874, %v874
        %v947 = vpack.c.bf16 %v876, %v876
        %v948 = vpack.c.bf16 %v879, %v879
        %v949 = vpack.c.bf16 %v881, %v881
        %v950 = vpack.c.bf16 %v884, %v884
        %v951 = vpack.c.bf16 %v886, %v886
        %952 = vst [vmem:[%s406] sm:$0xf] %v888
        %953 = vst [vmem:[%s406 + $0x4] sm:$0xf] %v889
        %954 = vst [vmem:[%s406 + $0x8] sm:$0xf] %v890
        %955 = vst [vmem:[%s406 + $0xc] sm:$0xf] %v891
        %956 = vst [vmem:[%s406 + $0x10] sm:$0xf] %v892
        %957 = vst [vmem:[%s406 + $0x14] sm:$0xf] %v893
        %958 = vst [vmem:[%s406 + $0x18] sm:$0xf] %v894
        %959 = vst [vmem:[%s406 + $0x1c] sm:$0xf] %v895
        %960 = vst [vmem:[%s406 + $0x20] sm:$0xf] %v896
        %961 = vst [vmem:[%s406 + $0x24] sm:$0xf] %v897
        %962 = vst [vmem:[%s406 + $0x28] sm:$0xf] %v898
        %963 = vst [vmem:[%s406 + $0x2c] sm:$0xf] %v899
        %964 = vst [vmem:[%s406 + $0x30] sm:$0xf] %v900
        %965 = vst [vmem:[%s406 + $0x34] sm:$0xf] %v901
        %966 = vst [vmem:[%s406 + $0x38] sm:$0xf] %v902
        %967 = vst [vmem:[%s406 + $0x3c] sm:$0xf] %v903
        %968 = vst [vmem:[%s406 + $0x40] sm:$0xf] %v904
        %969 = vst [vmem:[%s406 + $0x44] sm:$0xf] %v905
        %970 = vst [vmem:[%s406 + $0x48] sm:$0xf] %v906
        %971 = vst [vmem:[%s406 + $0x4c] sm:$0xf] %v907
        %972 = vst [vmem:[%s406 + $0x50] sm:$0xf] %v908
        %973 = vst [vmem:[%s406 + $0x54] sm:$0xf] %v909
        %974 = vst [vmem:[%s406 + $0x58] sm:$0xf] %v910
        %975 = vst [vmem:[%s406 + $0x5c] sm:$0xf] %v911
        %976 = vst [vmem:[%s406 + $0x60] sm:$0xf] %v912
        %977 = vst [vmem:[%s406 + $0x64] sm:$0xf] %v913
        %978 = vst [vmem:[%s406 + $0x68] sm:$0xf] %v914
        %979 = vst [vmem:[%s406 + $0x6c] sm:$0xf] %v915
        %980 = vst [vmem:[%s406 + $0x70] sm:$0xf] %v916
        %981 = vst [vmem:[%s406 + $0x74] sm:$0xf] %v917
        %982 = vst [vmem:[%s406 + $0x78] sm:$0xf] %v918
        %983 = vst [vmem:[%s406 + $0x7c] sm:$0xf] %v919
        %984 = vst [vmem:[%s406 + $0x80] sm:$0xf] %v920
        %985 = vst [vmem:[%s406 + $0x84] sm:$0xf] %v921
        %986 = vst [vmem:[%s406 + $0x88] sm:$0xf] %v922
        %987 = vst [vmem:[%s406 + $0x8c] sm:$0xf] %v923
        %988 = vst [vmem:[%s406 + $0x90] sm:$0xf] %v924
        %989 = vst [vmem:[%s406 + $0x94] sm:$0xf] %v925
        %990 = vst [vmem:[%s406 + $0x98] sm:$0xf] %v926
        %991 = vst [vmem:[%s406 + $0x9c] sm:$0xf] %v927
        %992 = vst [vmem:[%s406 + $0xa0] sm:$0xf] %v928
        %993 = vst [vmem:[%s406 + $0xa4] sm:$0xf] %v929
        %994 = vst [vmem:[%s406 + $0xa8] sm:$0xf] %v930
        %995 = vst [vmem:[%s406 + $0xac] sm:$0xf] %v931
        %996 = vst [vmem:[%s406 + $0xb0] sm:$0xf] %v932
        %997 = vst [vmem:[%s406 + $0xb4] sm:$0xf] %v933
        %998 = vst [vmem:[%s406 + $0xb8] sm:$0xf] %v934
        %999 = vst [vmem:[%s406 + $0xbc] sm:$0xf] %v935
        %1000 = vst [vmem:[%s406 + $0xc0] sm:$0xf] %v936
        %1001 = vst [vmem:[%s406 + $0xc4] sm:$0xf] %v937
        %1002 = vst [vmem:[%s406 + $0xc8] sm:$0xf] %v938
        %1003 = vst [vmem:[%s406 + $0xcc] sm:$0xf] %v939
        %1004 = vst [vmem:[%s406 + $0xd0] sm:$0xf] %v940
        %1005 = vst [vmem:[%s406 + $0xd4] sm:$0xf] %v941
        %1006 = vst [vmem:[%s406 + $0xd8] sm:$0xf] %v942
        %1007 = vst [vmem:[%s406 + $0xdc] sm:$0xf] %v943
        %1008 = vst [vmem:[%s406 + $0xe0] sm:$0xf] %v944
        %1009 = vst [vmem:[%s406 + $0xe4] sm:$0xf] %v945
        %1010 = vst [vmem:[%s406 + $0xe8] sm:$0xf] %v946
        %1011 = vst [vmem:[%s406 + $0xec] sm:$0xf] %v947
        %1012 = vst [vmem:[%s406 + $0xf0] sm:$0xf] %v948
        %1013 = vst [vmem:[%s406 + $0xf4] sm:$0xf] %v949
        %1014 = vst [vmem:[%s406 + $0xf8] sm:$0xf] %v950
        %1015 = vst [vmem:[%s406 + $0xfc] sm:$0xf] %v951
        %v1016 = vlaneseq
        %v1017 = vand.u32 %v1016, 127
        %vm1018 = vcmp.lt.s32.totalorder %v1017, 8
        %v1019 = vsel %vm1018, 0.0, -1e+09
        %v1020 = vadd.f32 %v573, %v1019
        %v1021 = vadd.f32 %v575, %v1019
        %v1022 = vadd.f32 %v578, %v1019
        %v1023 = vadd.f32 %v580, %v1019
        %v1024 = vadd.f32 %v583, %v1019
        %v1025 = vadd.f32 %v585, %v1019
        %v1026 = vadd.f32 %v588, %v1019
        %v1027 = vadd.f32 %v590, %v1019
        %v1028 = vadd.f32 %v593, %v1019
        %v1029 = vadd.f32 %v595, %v1019
        %v1030 = vadd.f32 %v598, %v1019
        %v1031 = vadd.f32 %v600, %v1019
        %v1032 = vadd.f32 %v603, %v1019
        %v1033 = vadd.f32 %v605, %v1019
        %v1034 = vadd.f32 %v608, %v1019
        %v1035 = vadd.f32 %v610, %v1019
        %v1036 = vadd.f32 %v665, %v1019
        %v1037 = vadd.f32 %v667, %v1019
        %v1038 = vadd.f32 %v670, %v1019
        %v1039 = vadd.f32 %v672, %v1019
        %v1040 = vadd.f32 %v675, %v1019
        %v1041 = vadd.f32 %v677, %v1019
        %v1042 = vadd.f32 %v680, %v1019
        %v1043 = vadd.f32 %v682, %v1019
        %v1044 = vadd.f32 %v685, %v1019
        %v1045 = vadd.f32 %v687, %v1019
        %v1046 = vadd.f32 %v690, %v1019
        %v1047 = vadd.f32 %v692, %v1019
        %v1048 = vadd.f32 %v695, %v1019
        %v1049 = vadd.f32 %v697, %v1019
        %v1050 = vadd.f32 %v700, %v1019
        %v1051 = vadd.f32 %v702, %v1019
        %v1052 = vadd.f32 %v757, %v1019
        %v1053 = vadd.f32 %v759, %v1019
        %v1054 = vadd.f32 %v762, %v1019
        %v1055 = vadd.f32 %v764, %v1019
        %v1056 = vadd.f32 %v767, %v1019
        %v1057 = vadd.f32 %v769, %v1019
        %v1058 = vadd.f32 %v772, %v1019
        %v1059 = vadd.f32 %v774, %v1019
        %v1060 = vadd.f32 %v777, %v1019
        %v1061 = vadd.f32 %v779, %v1019
        %v1062 = vadd.f32 %v782, %v1019
        %v1063 = vadd.f32 %v784, %v1019
        %v1064 = vadd.f32 %v787, %v1019
        %v1065 = vadd.f32 %v789, %v1019
        %v1066 = vadd.f32 %v792, %v1019
        %v1067 = vadd.f32 %v794, %v1019
        %v1068 = vadd.f32 %v849, %v1019
        %v1069 = vadd.f32 %v851, %v1019
        %v1070 = vadd.f32 %v854, %v1019
        %v1071 = vadd.f32 %v856, %v1019
        %v1072 = vadd.f32 %v859, %v1019
        %v1073 = vadd.f32 %v861, %v1019
        %v1074 = vadd.f32 %v864, %v1019
        %v1075 = vadd.f32 %v866, %v1019
        %v1076 = vadd.f32 %v869, %v1019
        %v1077 = vadd.f32 %v871, %v1019
        %v1078 = vadd.f32 %v874, %v1019
        %v1079 = vadd.f32 %v876, %v1019
        %v1080 = vadd.f32 %v879, %v1019
        %v1081 = vadd.f32 %v881, %v1019
        %v1082 = vadd.f32 %v884, %v1019
        %v1083 = vadd.f32 %v886, %v1019
        %1084 = vmax.xlane.f32.xlu0 %v1020
        %v1085 = vpop.xlane.xlu0 %1084
        %1086 = vmax.xlane.f32.xlu0 %v1021
        %v1087 = vpop.xlane.xlu0 %1086
        %1088 = vmax.xlane.f32.xlu0 %v1022
        %v1089 = vpop.xlane.xlu0 %1088
        %1090 = vmax.xlane.f32.xlu0 %v1023
        %v1091 = vpop.xlane.xlu0 %1090
        %1092 = vmax.xlane.f32.xlu0 %v1024
        %v1093 = vpop.xlane.xlu0 %1092
        %1094 = vmax.xlane.f32.xlu0 %v1025
        %v1095 = vpop.xlane.xlu0 %1094
        %1096 = vmax.xlane.f32.xlu0 %v1026
        %v1097 = vpop.xlane.xlu0 %1096
        %1098 = vmax.xlane.f32.xlu0 %v1027
        %v1099 = vpop.xlane.xlu0 %1098
        %1100 = vmax.xlane.f32.xlu0 %v1028
        %v1101 = vpop.xlane.xlu0 %1100
        %1102 = vmax.xlane.f32.xlu0 %v1029
        %v1103 = vpop.xlane.xlu0 %1102
        %1104 = vmax.xlane.f32.xlu0 %v1030
        %v1105 = vpop.xlane.xlu0 %1104
        %1106 = vmax.xlane.f32.xlu0 %v1031
        %v1107 = vpop.xlane.xlu0 %1106
        %1108 = vmax.xlane.f32.xlu0 %v1032
        %v1109 = vpop.xlane.xlu0 %1108
        %1110 = vmax.xlane.f32.xlu0 %v1033
        %v1111 = vpop.xlane.xlu0 %1110
        %1112 = vmax.xlane.f32.xlu0 %v1034
        %v1113 = vpop.xlane.xlu0 %1112
        %1114 = vmax.xlane.f32.xlu0 %v1035
        %v1115 = vpop.xlane.xlu0 %1114
        %1116 = vmax.xlane.f32.xlu0 %v1036
        %v1117 = vpop.xlane.xlu0 %1116
        %1118 = vmax.xlane.f32.xlu0 %v1037
        %v1119 = vpop.xlane.xlu0 %1118
        %1120 = vmax.xlane.f32.xlu0 %v1038
        %v1121 = vpop.xlane.xlu0 %1120
        %1122 = vmax.xlane.f32.xlu0 %v1039
        %v1123 = vpop.xlane.xlu0 %1122
        %1124 = vmax.xlane.f32.xlu0 %v1040
        %v1125 = vpop.xlane.xlu0 %1124
        %1126 = vmax.xlane.f32.xlu0 %v1041
        %v1127 = vpop.xlane.xlu0 %1126
        %1128 = vmax.xlane.f32.xlu0 %v1042
        %v1129 = vpop.xlane.xlu0 %1128
        %1130 = vmax.xlane.f32.xlu0 %v1043
        %v1131 = vpop.xlane.xlu0 %1130
        %1132 = vmax.xlane.f32.xlu0 %v1044
        %v1133 = vpop.xlane.xlu0 %1132
        %1134 = vmax.xlane.f32.xlu0 %v1045
        %v1135 = vpop.xlane.xlu0 %1134
        %1136 = vmax.xlane.f32.xlu0 %v1046
        %v1137 = vpop.xlane.xlu0 %1136
        %1138 = vmax.xlane.f32.xlu0 %v1047
        %v1139 = vpop.xlane.xlu0 %1138
        %1140 = vmax.xlane.f32.xlu0 %v1048
        %v1141 = vpop.xlane.xlu0 %1140
        %1142 = vmax.xlane.f32.xlu0 %v1049
        %v1143 = vpop.xlane.xlu0 %1142
        %1144 = vmax.xlane.f32.xlu0 %v1050
        %v1145 = vpop.xlane.xlu0 %1144
        %1146 = vmax.xlane.f32.xlu0 %v1051
        %v1147 = vpop.xlane.xlu0 %1146
        %1148 = vmax.xlane.f32.xlu0 %v1052
        %v1149 = vpop.xlane.xlu0 %1148
        %1150 = vmax.xlane.f32.xlu0 %v1053
        %v1151 = vpop.xlane.xlu0 %1150
        %1152 = vmax.xlane.f32.xlu0 %v1054
        %v1153 = vpop.xlane.xlu0 %1152
        %1154 = vmax.xlane.f32.xlu0 %v1055
        %v1155 = vpop.xlane.xlu0 %1154
        %1156 = vmax.xlane.f32.xlu0 %v1056
        %v1157 = vpop.xlane.xlu0 %1156
        %1158 = vmax.xlane.f32.xlu0 %v1057
        %v1159 = vpop.xlane.xlu0 %1158
        %1160 = vmax.xlane.f32.xlu0 %v1058
        %v1161 = vpop.xlane.xlu0 %1160
        %1162 = vmax.xlane.f32.xlu0 %v1059
        %v1163 = vpop.xlane.xlu0 %1162
        %1164 = vmax.xlane.f32.xlu0 %v1060
        %v1165 = vpop.xlane.xlu0 %1164
        %1166 = vmax.xlane.f32.xlu0 %v1061
        %v1167 = vpop.xlane.xlu0 %1166
        %1168 = vmax.xlane.f32.xlu0 %v1062
        %v1169 = vpop.xlane.xlu0 %1168
        %1170 = vmax.xlane.f32.xlu0 %v1063
        %v1171 = vpop.xlane.xlu0 %1170
        %1172 = vmax.xlane.f32.xlu0 %v1064
        %v1173 = vpop.xlane.xlu0 %1172
        %1174 = vmax.xlane.f32.xlu0 %v1065
        %v1175 = vpop.xlane.xlu0 %1174
        %1176 = vmax.xlane.f32.xlu0 %v1066
        %v1177 = vpop.xlane.xlu0 %1176
        %1178 = vmax.xlane.f32.xlu0 %v1067
        %v1179 = vpop.xlane.xlu0 %1178
        %1180 = vmax.xlane.f32.xlu0 %v1068
        %v1181 = vpop.xlane.xlu0 %1180
        %1182 = vmax.xlane.f32.xlu0 %v1069
        %v1183 = vpop.xlane.xlu0 %1182
        %1184 = vmax.xlane.f32.xlu0 %v1070
        %v1185 = vpop.xlane.xlu0 %1184
        %1186 = vmax.xlane.f32.xlu0 %v1071
        %v1187 = vpop.xlane.xlu0 %1186
        %1188 = vmax.xlane.f32.xlu0 %v1072
        %v1189 = vpop.xlane.xlu0 %1188
        %1190 = vmax.xlane.f32.xlu0 %v1073
        %v1191 = vpop.xlane.xlu0 %1190
        %1192 = vmax.xlane.f32.xlu0 %v1074
        %v1193 = vpop.xlane.xlu0 %1192
        %1194 = vmax.xlane.f32.xlu0 %v1075
        %v1195 = vpop.xlane.xlu0 %1194
        %1196 = vmax.xlane.f32.xlu0 %v1076
        %v1197 = vpop.xlane.xlu0 %1196
        %1198 = vmax.xlane.f32.xlu0 %v1077
        %v1199 = vpop.xlane.xlu0 %1198
        %1200 = vmax.xlane.f32.xlu0 %v1078
        %v1201 = vpop.xlane.xlu0 %1200
        %1202 = vmax.xlane.f32.xlu0 %v1079
        %v1203 = vpop.xlane.xlu0 %1202
        %1204 = vmax.xlane.f32.xlu0 %v1080
        %v1205 = vpop.xlane.xlu0 %1204
        %1206 = vmax.xlane.f32.xlu0 %v1081
        %v1207 = vpop.xlane.xlu0 %1206
        %1208 = vmax.xlane.f32.xlu0 %v1082
        %v1209 = vpop.xlane.xlu0 %1208
        %1210 = vmax.xlane.f32.xlu0 %v1083
        %v1211 = vpop.xlane.xlu0 %1210
        %v1212 = vsub.f32 %v1020, %v1085
        %v1213 = vsub.f32 %v1021, %v1087
        %v1214 = vsub.f32 %v1022, %v1089
        %v1215 = vsub.f32 %v1023, %v1091
        %v1216 = vsub.f32 %v1024, %v1093
        %v1217 = vsub.f32 %v1025, %v1095
        %v1218 = vsub.f32 %v1026, %v1097
        %v1219 = vsub.f32 %v1027, %v1099
        %v1220 = vsub.f32 %v1028, %v1101
        %v1221 = vsub.f32 %v1029, %v1103
        %v1222 = vsub.f32 %v1030, %v1105
        %v1223 = vsub.f32 %v1031, %v1107
        %v1224 = vsub.f32 %v1032, %v1109
        %v1225 = vsub.f32 %v1033, %v1111
        %v1226 = vsub.f32 %v1034, %v1113
        %v1227 = vsub.f32 %v1035, %v1115
        %v1228 = vsub.f32 %v1036, %v1117
        %v1229 = vsub.f32 %v1037, %v1119
        %v1230 = vsub.f32 %v1038, %v1121
        %v1231 = vsub.f32 %v1039, %v1123
        %v1232 = vsub.f32 %v1040, %v1125
        %v1233 = vsub.f32 %v1041, %v1127
        %v1234 = vsub.f32 %v1042, %v1129
        %v1235 = vsub.f32 %v1043, %v1131
        %v1236 = vsub.f32 %v1044, %v1133
        %v1237 = vsub.f32 %v1045, %v1135
        %v1238 = vsub.f32 %v1046, %v1137
        %v1239 = vsub.f32 %v1047, %v1139
        %v1240 = vsub.f32 %v1048, %v1141
        %v1241 = vsub.f32 %v1049, %v1143
        %v1242 = vsub.f32 %v1050, %v1145
        %v1243 = vsub.f32 %v1051, %v1147
        %v1244 = vsub.f32 %v1052, %v1149
        %v1245 = vsub.f32 %v1053, %v1151
        %v1246 = vsub.f32 %v1054, %v1153
        %v1247 = vsub.f32 %v1055, %v1155
        %v1248 = vsub.f32 %v1056, %v1157
        %v1249 = vsub.f32 %v1057, %v1159
        %v1250 = vsub.f32 %v1058, %v1161
        %v1251 = vsub.f32 %v1059, %v1163
        %v1252 = vsub.f32 %v1060, %v1165
        %v1253 = vsub.f32 %v1061, %v1167
        %v1254 = vsub.f32 %v1062, %v1169
        %v1255 = vsub.f32 %v1063, %v1171
        %v1256 = vsub.f32 %v1064, %v1173
        %v1257 = vsub.f32 %v1065, %v1175
        %v1258 = vsub.f32 %v1066, %v1177
        %v1259 = vsub.f32 %v1067, %v1179
        %v1260 = vsub.f32 %v1068, %v1181
        %v1261 = vsub.f32 %v1069, %v1183
        %v1262 = vsub.f32 %v1070, %v1185
        %v1263 = vsub.f32 %v1071, %v1187
        %v1264 = vsub.f32 %v1072, %v1189
        %v1265 = vsub.f32 %v1073, %v1191
        %v1266 = vsub.f32 %v1074, %v1193
        %v1267 = vsub.f32 %v1075, %v1195
        %v1268 = vsub.f32 %v1076, %v1197
        %v1269 = vsub.f32 %v1077, %v1199
        %v1270 = vsub.f32 %v1078, %v1201
        %v1271 = vsub.f32 %v1079, %v1203
        %v1272 = vsub.f32 %v1080, %v1205
        %v1273 = vsub.f32 %v1081, %v1207
        %v1274 = vsub.f32 %v1082, %v1209
        %v1275 = vsub.f32 %v1083, %v1211
        %v1276 = vpack.c.bf16 %v1212, %v1212
        %v1277 = vpack.c.bf16 %v1213, %v1213
        %v1278 = vpack.c.bf16 %v1214, %v1214
        %v1279 = vpack.c.bf16 %v1215, %v1215
        %v1280 = vpack.c.bf16 %v1216, %v1216
        %v1281 = vpack.c.bf16 %v1217, %v1217
        %v1282 = vpack.c.bf16 %v1218, %v1218
        %v1283 = vpack.c.bf16 %v1219, %v1219
        %v1284 = vpack.c.bf16 %v1220, %v1220
        %v1285 = vpack.c.bf16 %v1221, %v1221
        %v1286 = vpack.c.bf16 %v1222, %v1222
        %v1287 = vpack.c.bf16 %v1223, %v1223
        %v1288 = vpack.c.bf16 %v1224, %v1224
        %v1289 = vpack.c.bf16 %v1225, %v1225
        %v1290 = vpack.c.bf16 %v1226, %v1226
        %v1291 = vpack.c.bf16 %v1227, %v1227
        %v1292 = vpack.c.bf16 %v1228, %v1228
        %v1293 = vpack.c.bf16 %v1229, %v1229
        %v1294 = vpack.c.bf16 %v1230, %v1230
        %v1295 = vpack.c.bf16 %v1231, %v1231
        %v1296 = vpack.c.bf16 %v1232, %v1232
        %v1297 = vpack.c.bf16 %v1233, %v1233
        %v1298 = vpack.c.bf16 %v1234, %v1234
        %v1299 = vpack.c.bf16 %v1235, %v1235
        %v1300 = vpack.c.bf16 %v1236, %v1236
        %v1301 = vpack.c.bf16 %v1237, %v1237
        %v1302 = vpack.c.bf16 %v1238, %v1238
        %v1303 = vpack.c.bf16 %v1239, %v1239
        %v1304 = vpack.c.bf16 %v1240, %v1240
        %v1305 = vpack.c.bf16 %v1241, %v1241
        %v1306 = vpack.c.bf16 %v1242, %v1242
        %v1307 = vpack.c.bf16 %v1243, %v1243
        %v1308 = vpack.c.bf16 %v1244, %v1244
        %v1309 = vpack.c.bf16 %v1245, %v1245
        %v1310 = vpack.c.bf16 %v1246, %v1246
        %v1311 = vpack.c.bf16 %v1247, %v1247
        %v1312 = vpack.c.bf16 %v1248, %v1248
        %v1313 = vpack.c.bf16 %v1249, %v1249
        %v1314 = vpack.c.bf16 %v1250, %v1250
        %v1315 = vpack.c.bf16 %v1251, %v1251
        %v1316 = vpack.c.bf16 %v1252, %v1252
        %v1317 = vpack.c.bf16 %v1253, %v1253
        %v1318 = vpack.c.bf16 %v1254, %v1254
        %v1319 = vpack.c.bf16 %v1255, %v1255
        %v1320 = vpack.c.bf16 %v1256, %v1256
        %v1321 = vpack.c.bf16 %v1257, %v1257
        %v1322 = vpack.c.bf16 %v1258, %v1258
        %v1323 = vpack.c.bf16 %v1259, %v1259
        %v1324 = vpack.c.bf16 %v1260, %v1260
        %v1325 = vpack.c.bf16 %v1261, %v1261
        %v1326 = vpack.c.bf16 %v1262, %v1262
        %v1327 = vpack.c.bf16 %v1263, %v1263
        %v1328 = vpack.c.bf16 %v1264, %v1264
        %v1329 = vpack.c.bf16 %v1265, %v1265
        %v1330 = vpack.c.bf16 %v1266, %v1266
        %v1331 = vpack.c.bf16 %v1267, %v1267
        %v1332 = vpack.c.bf16 %v1268, %v1268
        %v1333 = vpack.c.bf16 %v1269, %v1269
        %v1334 = vpack.c.bf16 %v1270, %v1270
        %v1335 = vpack.c.bf16 %v1271, %v1271
        %v1336 = vpack.c.bf16 %v1272, %v1272
        %v1337 = vpack.c.bf16 %v1273, %v1273
        %v1338 = vpack.c.bf16 %v1274, %v1274
        %v1339 = vpack.c.bf16 %v1275, %v1275
        %v1340 = vunpack.c.l.bf16 %v1276
        %v1341 = vunpack.c.l.bf16 %v1277
        %v1342 = vunpack.c.l.bf16 %v1278
        %v1343 = vunpack.c.l.bf16 %v1279
        %v1344 = vunpack.c.l.bf16 %v1280
        %v1345 = vunpack.c.l.bf16 %v1281
        %v1346 = vunpack.c.l.bf16 %v1282
        %v1347 = vunpack.c.l.bf16 %v1283
        %v1348 = vunpack.c.l.bf16 %v1284
        %v1349 = vunpack.c.l.bf16 %v1285
        %v1350 = vunpack.c.l.bf16 %v1286
        %v1351 = vunpack.c.l.bf16 %v1287
        %v1352 = vunpack.c.l.bf16 %v1288
        %v1353 = vunpack.c.l.bf16 %v1289
        %v1354 = vunpack.c.l.bf16 %v1290
        %v1355 = vunpack.c.l.bf16 %v1291
        %v1356 = vunpack.c.l.bf16 %v1292
        %v1357 = vunpack.c.l.bf16 %v1293
        %v1358 = vunpack.c.l.bf16 %v1294
        %v1359 = vunpack.c.l.bf16 %v1295
        %v1360 = vunpack.c.l.bf16 %v1296
        %v1361 = vunpack.c.l.bf16 %v1297
        %v1362 = vunpack.c.l.bf16 %v1298
        %v1363 = vunpack.c.l.bf16 %v1299
        %v1364 = vunpack.c.l.bf16 %v1300
        %v1365 = vunpack.c.l.bf16 %v1301
        %v1366 = vunpack.c.l.bf16 %v1302
        %v1367 = vunpack.c.l.bf16 %v1303
        %v1368 = vunpack.c.l.bf16 %v1304
        %v1369 = vunpack.c.l.bf16 %v1305
        %v1370 = vunpack.c.l.bf16 %v1306
        %v1371 = vunpack.c.l.bf16 %v1307
        %v1372 = vunpack.c.l.bf16 %v1308
        %v1373 = vunpack.c.l.bf16 %v1309
        %v1374 = vunpack.c.l.bf16 %v1310
        %v1375 = vunpack.c.l.bf16 %v1311
        %v1376 = vunpack.c.l.bf16 %v1312
        %v1377 = vunpack.c.l.bf16 %v1313
        %v1378 = vunpack.c.l.bf16 %v1314
        %v1379 = vunpack.c.l.bf16 %v1315
        %v1380 = vunpack.c.l.bf16 %v1316
        %v1381 = vunpack.c.l.bf16 %v1317
        %v1382 = vunpack.c.l.bf16 %v1318
        %v1383 = vunpack.c.l.bf16 %v1319
        %v1384 = vunpack.c.l.bf16 %v1320
        %v1385 = vunpack.c.l.bf16 %v1321
        %v1386 = vunpack.c.l.bf16 %v1322
        %v1387 = vunpack.c.l.bf16 %v1323
        %v1388 = vunpack.c.l.bf16 %v1324
        %v1389 = vunpack.c.l.bf16 %v1325
        %v1390 = vunpack.c.l.bf16 %v1326
        %v1391 = vunpack.c.l.bf16 %v1327
        %v1392 = vunpack.c.l.bf16 %v1328
        %v1393 = vunpack.c.l.bf16 %v1329
        %v1394 = vunpack.c.l.bf16 %v1330
        %v1395 = vunpack.c.l.bf16 %v1331
        %v1396 = vunpack.c.l.bf16 %v1332
        %v1397 = vunpack.c.l.bf16 %v1333
        %v1398 = vunpack.c.l.bf16 %v1334
        %v1399 = vunpack.c.l.bf16 %v1335
        %v1400 = vunpack.c.l.bf16 %v1336
        %v1401 = vunpack.c.l.bf16 %v1337
        %v1402 = vunpack.c.l.bf16 %v1338
        %v1403 = vunpack.c.l.bf16 %v1339
        %v1404 = vmul.f32 %v1340, 1.442695
        %v1405 = vpow.pop %v1404
        %v1406 = vmul.f32 %v1341, 1.442695
        %v1407 = vpow.pop %v1406
        %v1408 = vmul.f32 %v1342, 1.442695
        %v1409 = vpow.pop %v1408
        %v1410 = vmul.f32 %v1343, 1.442695
        %v1411 = vpow.pop %v1410
        %v1412 = vmul.f32 %v1344, 1.442695
        %v1413 = vpow.pop %v1412
        %v1414 = vmul.f32 %v1345, 1.442695
        %v1415 = vpow.pop %v1414
        %v1416 = vmul.f32 %v1346, 1.442695
        %v1417 = vpow.pop %v1416
        %v1418 = vmul.f32 %v1347, 1.442695
        %v1419 = vpow.pop %v1418
        %v1420 = vmul.f32 %v1348, 1.442695
        %v1421 = vpow.pop %v1420
        %v1422 = vmul.f32 %v1349, 1.442695
        %v1423 = vpow.pop %v1422
        %v1424 = vmul.f32 %v1350, 1.442695
        %v1425 = vpow.pop %v1424
        %v1426 = vmul.f32 %v1351, 1.442695
        %v1427 = vpow.pop %v1426
        %v1428 = vmul.f32 %v1352, 1.442695
        %v1429 = vpow.pop %v1428
        %v1430 = vmul.f32 %v1353, 1.442695
        %v1431 = vpow.pop %v1430
        %v1432 = vmul.f32 %v1354, 1.442695
        %v1433 = vpow.pop %v1432
        %v1434 = vmul.f32 %v1355, 1.442695
        %v1435 = vpow.pop %v1434
        %v1436 = vmul.f32 %v1356, 1.442695
        %v1437 = vpow.pop %v1436
        %v1438 = vmul.f32 %v1357, 1.442695
        %v1439 = vpow.pop %v1438
        %v1440 = vmul.f32 %v1358, 1.442695
        %v1441 = vpow.pop %v1440
        %v1442 = vmul.f32 %v1359, 1.442695
        %v1443 = vpow.pop %v1442
        %v1444 = vmul.f32 %v1360, 1.442695
        %v1445 = vpow.pop %v1444
        %v1446 = vmul.f32 %v1361, 1.442695
        %v1447 = vpow.pop %v1446
        %v1448 = vmul.f32 %v1362, 1.442695
        %v1449 = vpow.pop %v1448
        %v1450 = vmul.f32 %v1363, 1.442695
        %v1451 = vpow.pop %v1450
        %v1452 = vmul.f32 %v1364, 1.442695
        %v1453 = vpow.pop %v1452
        %v1454 = vmul.f32 %v1365, 1.442695
        %v1455 = vpow.pop %v1454
        %v1456 = vmul.f32 %v1366, 1.442695
        %v1457 = vpow.pop %v1456
        %v1458 = vmul.f32 %v1367, 1.442695
        %v1459 = vpow.pop %v1458
        %v1460 = vmul.f32 %v1368, 1.442695
        %v1461 = vpow.pop %v1460
        %v1462 = vmul.f32 %v1369, 1.442695
        %v1463 = vpow.pop %v1462
        %v1464 = vmul.f32 %v1370, 1.442695
        %v1465 = vpow.pop %v1464
        %v1466 = vmul.f32 %v1371, 1.442695
        %v1467 = vpow.pop %v1466
        %v1468 = vmul.f32 %v1372, 1.442695
        %v1469 = vpow.pop %v1468
        %v1470 = vmul.f32 %v1373, 1.442695
        %v1471 = vpow.pop %v1470
        %v1472 = vmul.f32 %v1374, 1.442695
        %v1473 = vpow.pop %v1472
        %v1474 = vmul.f32 %v1375, 1.442695
        %v1475 = vpow.pop %v1474
        %v1476 = vmul.f32 %v1376, 1.442695
        %v1477 = vpow.pop %v1476
        %v1478 = vmul.f32 %v1377, 1.442695
        %v1479 = vpow.pop %v1478
        %v1480 = vmul.f32 %v1378, 1.442695
        %v1481 = vpow.pop %v1480
        %v1482 = vmul.f32 %v1379, 1.442695
        %v1483 = vpow.pop %v1482
        %v1484 = vmul.f32 %v1380, 1.442695
        %v1485 = vpow.pop %v1484
        %v1486 = vmul.f32 %v1381, 1.442695
        %v1487 = vpow.pop %v1486
        %v1488 = vmul.f32 %v1382, 1.442695
        %v1489 = vpow.pop %v1488
        %v1490 = vmul.f32 %v1383, 1.442695
        %v1491 = vpow.pop %v1490
        %v1492 = vmul.f32 %v1384, 1.442695
        %v1493 = vpow.pop %v1492
        %v1494 = vmul.f32 %v1385, 1.442695
        %v1495 = vpow.pop %v1494
        %v1496 = vmul.f32 %v1386, 1.442695
        %v1497 = vpow.pop %v1496
        %v1498 = vmul.f32 %v1387, 1.442695
        %v1499 = vpow.pop %v1498
        %v1500 = vmul.f32 %v1388, 1.442695
        %v1501 = vpow.pop %v1500
        %v1502 = vmul.f32 %v1389, 1.442695
        %v1503 = vpow.pop %v1502
        %v1504 = vmul.f32 %v1390, 1.442695
        %v1505 = vpow.pop %v1504
        %v1506 = vmul.f32 %v1391, 1.442695
        %v1507 = vpow.pop %v1506
        %v1508 = vmul.f32 %v1392, 1.442695
        %v1509 = vpow.pop %v1508
        %v1510 = vmul.f32 %v1393, 1.442695
        %v1511 = vpow.pop %v1510
        %v1512 = vmul.f32 %v1394, 1.442695
        %v1513 = vpow.pop %v1512
        %v1514 = vmul.f32 %v1395, 1.442695
        %v1515 = vpow.pop %v1514
        %v1516 = vmul.f32 %v1396, 1.442695
        %v1517 = vpow.pop %v1516
        %v1518 = vmul.f32 %v1397, 1.442695
        %v1519 = vpow.pop %v1518
        %v1520 = vmul.f32 %v1398, 1.442695
        %v1521 = vpow.pop %v1520
        %v1522 = vmul.f32 %v1399, 1.442695
        %v1523 = vpow.pop %v1522
        %v1524 = vmul.f32 %v1400, 1.442695
        %v1525 = vpow.pop %v1524
        %v1526 = vmul.f32 %v1401, 1.442695
        %v1527 = vpow.pop %v1526
        %v1528 = vmul.f32 %v1402, 1.442695
        %v1529 = vpow.pop %v1528
        %v1530 = vmul.f32 %v1403, 1.442695
        %v1531 = vpow.pop %v1530
        %v1532 = vpack.c.bf16 %v1405, %v1405
        %v1533 = vpack.c.bf16 %v1407, %v1407
        %v1534 = vpack.c.bf16 %v1409, %v1409
        %v1535 = vpack.c.bf16 %v1411, %v1411
        %v1536 = vpack.c.bf16 %v1413, %v1413
        %v1537 = vpack.c.bf16 %v1415, %v1415
        %v1538 = vpack.c.bf16 %v1417, %v1417
        %v1539 = vpack.c.bf16 %v1419, %v1419
        %v1540 = vpack.c.bf16 %v1421, %v1421
        %v1541 = vpack.c.bf16 %v1423, %v1423
        %v1542 = vpack.c.bf16 %v1425, %v1425
        %v1543 = vpack.c.bf16 %v1427, %v1427
        %v1544 = vpack.c.bf16 %v1429, %v1429
        %v1545 = vpack.c.bf16 %v1431, %v1431
        %v1546 = vpack.c.bf16 %v1433, %v1433
        %v1547 = vpack.c.bf16 %v1435, %v1435
        %v1548 = vpack.c.bf16 %v1437, %v1437
        %v1549 = vpack.c.bf16 %v1439, %v1439
        %v1550 = vpack.c.bf16 %v1441, %v1441
        %v1551 = vpack.c.bf16 %v1443, %v1443
        %v1552 = vpack.c.bf16 %v1445, %v1445
        %v1553 = vpack.c.bf16 %v1447, %v1447
        %v1554 = vpack.c.bf16 %v1449, %v1449
        %v1555 = vpack.c.bf16 %v1451, %v1451
        %v1556 = vpack.c.bf16 %v1453, %v1453
        %v1557 = vpack.c.bf16 %v1455, %v1455
        %v1558 = vpack.c.bf16 %v1457, %v1457
        %v1559 = vpack.c.bf16 %v1459, %v1459
        %v1560 = vpack.c.bf16 %v1461, %v1461
        %v1561 = vpack.c.bf16 %v1463, %v1463
        %v1562 = vpack.c.bf16 %v1465, %v1465
        %v1563 = vpack.c.bf16 %v1467, %v1467
        %v1564 = vpack.c.bf16 %v1469, %v1469
        %v1565 = vpack.c.bf16 %v1471, %v1471
        %v1566 = vpack.c.bf16 %v1473, %v1473
        %v1567 = vpack.c.bf16 %v1475, %v1475
        %v1568 = vpack.c.bf16 %v1477, %v1477
        %v1569 = vpack.c.bf16 %v1479, %v1479
        %v1570 = vpack.c.bf16 %v1481, %v1481
        %v1571 = vpack.c.bf16 %v1483, %v1483
        %v1572 = vpack.c.bf16 %v1485, %v1485
        %v1573 = vpack.c.bf16 %v1487, %v1487
        %v1574 = vpack.c.bf16 %v1489, %v1489
        %v1575 = vpack.c.bf16 %v1491, %v1491
        %v1576 = vpack.c.bf16 %v1493, %v1493
        %v1577 = vpack.c.bf16 %v1495, %v1495
        %v1578 = vpack.c.bf16 %v1497, %v1497
        %v1579 = vpack.c.bf16 %v1499, %v1499
        %v1580 = vpack.c.bf16 %v1501, %v1501
        %v1581 = vpack.c.bf16 %v1503, %v1503
        %v1582 = vpack.c.bf16 %v1505, %v1505
        %v1583 = vpack.c.bf16 %v1507, %v1507
        %v1584 = vpack.c.bf16 %v1509, %v1509
        %v1585 = vpack.c.bf16 %v1511, %v1511
        %v1586 = vpack.c.bf16 %v1513, %v1513
        %v1587 = vpack.c.bf16 %v1515, %v1515
        %v1588 = vpack.c.bf16 %v1517, %v1517
        %v1589 = vpack.c.bf16 %v1519, %v1519
        %v1590 = vpack.c.bf16 %v1521, %v1521
        %v1591 = vpack.c.bf16 %v1523, %v1523
        %v1592 = vpack.c.bf16 %v1525, %v1525
        %v1593 = vpack.c.bf16 %v1527, %v1527
        %v1594 = vpack.c.bf16 %v1529, %v1529
        %v1595 = vpack.c.bf16 %v1531, %v1531
        %v1596 = vunpack.c.l.bf16 %v1532
        %v1597 = vunpack.c.l.bf16 %v1533
        %v1598 = vunpack.c.l.bf16 %v1534
        %v1599 = vunpack.c.l.bf16 %v1535
        %v1600 = vunpack.c.l.bf16 %v1536
        %v1601 = vunpack.c.l.bf16 %v1537
        %v1602 = vunpack.c.l.bf16 %v1538
        %v1603 = vunpack.c.l.bf16 %v1539
        %v1604 = vunpack.c.l.bf16 %v1540
        %v1605 = vunpack.c.l.bf16 %v1541
        %v1606 = vunpack.c.l.bf16 %v1542
        %v1607 = vunpack.c.l.bf16 %v1543
        %v1608 = vunpack.c.l.bf16 %v1544
        %v1609 = vunpack.c.l.bf16 %v1545
        %v1610 = vunpack.c.l.bf16 %v1546
        %v1611 = vunpack.c.l.bf16 %v1547
        %v1612 = vunpack.c.l.bf16 %v1548
        %v1613 = vunpack.c.l.bf16 %v1549
        %v1614 = vunpack.c.l.bf16 %v1550
        %v1615 = vunpack.c.l.bf16 %v1551
        %v1616 = vunpack.c.l.bf16 %v1552
        %v1617 = vunpack.c.l.bf16 %v1553
        %v1618 = vunpack.c.l.bf16 %v1554
        %v1619 = vunpack.c.l.bf16 %v1555
        %v1620 = vunpack.c.l.bf16 %v1556
        %v1621 = vunpack.c.l.bf16 %v1557
        %v1622 = vunpack.c.l.bf16 %v1558
        %v1623 = vunpack.c.l.bf16 %v1559
        %v1624 = vunpack.c.l.bf16 %v1560
        %v1625 = vunpack.c.l.bf16 %v1561
        %v1626 = vunpack.c.l.bf16 %v1562
        %v1627 = vunpack.c.l.bf16 %v1563
        %v1628 = vunpack.c.l.bf16 %v1564
        %v1629 = vunpack.c.l.bf16 %v1565
        %v1630 = vunpack.c.l.bf16 %v1566
        %v1631 = vunpack.c.l.bf16 %v1567
        %v1632 = vunpack.c.l.bf16 %v1568
        %v1633 = vunpack.c.l.bf16 %v1569
        %v1634 = vunpack.c.l.bf16 %v1570
        %v1635 = vunpack.c.l.bf16 %v1571
        %v1636 = vunpack.c.l.bf16 %v1572
        %v1637 = vunpack.c.l.bf16 %v1573
        %v1638 = vunpack.c.l.bf16 %v1574
        %v1639 = vunpack.c.l.bf16 %v1575
        %v1640 = vunpack.c.l.bf16 %v1576
        %v1641 = vunpack.c.l.bf16 %v1577
        %v1642 = vunpack.c.l.bf16 %v1578
        %v1643 = vunpack.c.l.bf16 %v1579
        %v1644 = vunpack.c.l.bf16 %v1580
        %v1645 = vunpack.c.l.bf16 %v1581
        %v1646 = vunpack.c.l.bf16 %v1582
        %v1647 = vunpack.c.l.bf16 %v1583
        %v1648 = vunpack.c.l.bf16 %v1584
        %v1649 = vunpack.c.l.bf16 %v1585
        %v1650 = vunpack.c.l.bf16 %v1586
        %v1651 = vunpack.c.l.bf16 %v1587
        %v1652 = vunpack.c.l.bf16 %v1588
        %v1653 = vunpack.c.l.bf16 %v1589
        %v1654 = vunpack.c.l.bf16 %v1590
        %v1655 = vunpack.c.l.bf16 %v1591
        %v1656 = vunpack.c.l.bf16 %v1592
        %v1657 = vunpack.c.l.bf16 %v1593
        %v1658 = vunpack.c.l.bf16 %v1594
        %v1659 = vunpack.c.l.bf16 %v1595
        %1660 = vadd.xlane.f32.xlu0 %v1596
        %v1661 = vpop.xlane.xlu0 %1660
        %1662 = vadd.xlane.f32.xlu0 %v1597
        %v1663 = vpop.xlane.xlu0 %1662
        %1664 = vadd.xlane.f32.xlu0 %v1598
        %v1665 = vpop.xlane.xlu0 %1664
        %1666 = vadd.xlane.f32.xlu0 %v1599
        %v1667 = vpop.xlane.xlu0 %1666
        %1668 = vadd.xlane.f32.xlu0 %v1600
        %v1669 = vpop.xlane.xlu0 %1668
        %1670 = vadd.xlane.f32.xlu0 %v1601
        %v1671 = vpop.xlane.xlu0 %1670
        %1672 = vadd.xlane.f32.xlu0 %v1602
        %v1673 = vpop.xlane.xlu0 %1672
        %1674 = vadd.xlane.f32.xlu0 %v1603
        %v1675 = vpop.xlane.xlu0 %1674
        %1676 = vadd.xlane.f32.xlu0 %v1604
        %v1677 = vpop.xlane.xlu0 %1676
        %1678 = vadd.xlane.f32.xlu0 %v1605
        %v1679 = vpop.xlane.xlu0 %1678
        %1680 = vadd.xlane.f32.xlu0 %v1606
        %v1681 = vpop.xlane.xlu0 %1680
        %1682 = vadd.xlane.f32.xlu0 %v1607
        %v1683 = vpop.xlane.xlu0 %1682
        %1684 = vadd.xlane.f32.xlu0 %v1608
        %v1685 = vpop.xlane.xlu0 %1684
        %1686 = vadd.xlane.f32.xlu0 %v1609
        %v1687 = vpop.xlane.xlu0 %1686
        %1688 = vadd.xlane.f32.xlu0 %v1610
        %v1689 = vpop.xlane.xlu0 %1688
        %1690 = vadd.xlane.f32.xlu0 %v1611
        %v1691 = vpop.xlane.xlu0 %1690
        %1692 = vadd.xlane.f32.xlu0 %v1612
        %v1693 = vpop.xlane.xlu0 %1692
        %1694 = vadd.xlane.f32.xlu0 %v1613
        %v1695 = vpop.xlane.xlu0 %1694
        %1696 = vadd.xlane.f32.xlu0 %v1614
        %v1697 = vpop.xlane.xlu0 %1696
        %1698 = vadd.xlane.f32.xlu0 %v1615
        %v1699 = vpop.xlane.xlu0 %1698
        %1700 = vadd.xlane.f32.xlu0 %v1616
        %v1701 = vpop.xlane.xlu0 %1700
        %1702 = vadd.xlane.f32.xlu0 %v1617
        %v1703 = vpop.xlane.xlu0 %1702
        %1704 = vadd.xlane.f32.xlu0 %v1618
        %v1705 = vpop.xlane.xlu0 %1704
        %1706 = vadd.xlane.f32.xlu0 %v1619
        %v1707 = vpop.xlane.xlu0 %1706
        %1708 = vadd.xlane.f32.xlu0 %v1620
        %v1709 = vpop.xlane.xlu0 %1708
        %1710 = vadd.xlane.f32.xlu0 %v1621
        %v1711 = vpop.xlane.xlu0 %1710
        %1712 = vadd.xlane.f32.xlu0 %v1622
        %v1713 = vpop.xlane.xlu0 %1712
        %1714 = vadd.xlane.f32.xlu0 %v1623
        %v1715 = vpop.xlane.xlu0 %1714
        %1716 = vadd.xlane.f32.xlu0 %v1624
        %v1717 = vpop.xlane.xlu0 %1716
        %1718 = vadd.xlane.f32.xlu0 %v1625
        %v1719 = vpop.xlane.xlu0 %1718
        %1720 = vadd.xlane.f32.xlu0 %v1626
        %v1721 = vpop.xlane.xlu0 %1720
        %1722 = vadd.xlane.f32.xlu0 %v1627
        %v1723 = vpop.xlane.xlu0 %1722
        %1724 = vadd.xlane.f32.xlu0 %v1628
        %v1725 = vpop.xlane.xlu0 %1724
        %1726 = vadd.xlane.f32.xlu0 %v1629
        %v1727 = vpop.xlane.xlu0 %1726
        %1728 = vadd.xlane.f32.xlu0 %v1630
        %v1729 = vpop.xlane.xlu0 %1728
        %1730 = vadd.xlane.f32.xlu0 %v1631
        %v1731 = vpop.xlane.xlu0 %1730
        %1732 = vadd.xlane.f32.xlu0 %v1632
        %v1733 = vpop.xlane.xlu0 %1732
        %1734 = vadd.xlane.f32.xlu0 %v1633
        %v1735 = vpop.xlane.xlu0 %1734
        %1736 = vadd.xlane.f32.xlu0 %v1634
        %v1737 = vpop.xlane.xlu0 %1736
        %1738 = vadd.xlane.f32.xlu0 %v1635
        %v1739 = vpop.xlane.xlu0 %1738
        %1740 = vadd.xlane.f32.xlu0 %v1636
        %v1741 = vpop.xlane.xlu0 %1740
        %1742 = vadd.xlane.f32.xlu0 %v1637
        %v1743 = vpop.xlane.xlu0 %1742
        %1744 = vadd.xlane.f32.xlu0 %v1638
        %v1745 = vpop.xlane.xlu0 %1744
        %1746 = vadd.xlane.f32.xlu0 %v1639
        %v1747 = vpop.xlane.xlu0 %1746
        %1748 = vadd.xlane.f32.xlu0 %v1640
        %v1749 = vpop.xlane.xlu0 %1748
        %1750 = vadd.xlane.f32.xlu0 %v1641
        %v1751 = vpop.xlane.xlu0 %1750
        %1752 = vadd.xlane.f32.xlu0 %v1642
        %v1753 = vpop.xlane.xlu0 %1752
        %1754 = vadd.xlane.f32.xlu0 %v1643
        %v1755 = vpop.xlane.xlu0 %1754
        %1756 = vadd.xlane.f32.xlu0 %v1644
        %v1757 = vpop.xlane.xlu0 %1756
        %1758 = vadd.xlane.f32.xlu0 %v1645
        %v1759 = vpop.xlane.xlu0 %1758
        %1760 = vadd.xlane.f32.xlu0 %v1646
        %v1761 = vpop.xlane.xlu0 %1760
        %1762 = vadd.xlane.f32.xlu0 %v1647
        %v1763 = vpop.xlane.xlu0 %1762
        %1764 = vadd.xlane.f32.xlu0 %v1648
        %v1765 = vpop.xlane.xlu0 %1764
        %1766 = vadd.xlane.f32.xlu0 %v1649
        %v1767 = vpop.xlane.xlu0 %1766
        %1768 = vadd.xlane.f32.xlu0 %v1650
        %v1769 = vpop.xlane.xlu0 %1768
        %1770 = vadd.xlane.f32.xlu0 %v1651
        %v1771 = vpop.xlane.xlu0 %1770
        %1772 = vadd.xlane.f32.xlu0 %v1652
        %v1773 = vpop.xlane.xlu0 %1772
        %1774 = vadd.xlane.f32.xlu0 %v1653
        %v1775 = vpop.xlane.xlu0 %1774
        %1776 = vadd.xlane.f32.xlu0 %v1654
        %v1777 = vpop.xlane.xlu0 %1776
        %1778 = vadd.xlane.f32.xlu0 %v1655
        %v1779 = vpop.xlane.xlu0 %1778
        %1780 = vadd.xlane.f32.xlu0 %v1656
        %v1781 = vpop.xlane.xlu0 %1780
        %1782 = vadd.xlane.f32.xlu0 %v1657
        %v1783 = vpop.xlane.xlu0 %1782
        %1784 = vadd.xlane.f32.xlu0 %v1658
        %v1785 = vpop.xlane.xlu0 %1784
        %1786 = vadd.xlane.f32.xlu0 %v1659
        %v1787 = vpop.xlane.xlu0 %1786
        %v1788 = vrcp.pop %v1661
        %v1789 = vrcp.pop %v1663
        %v1790 = vrcp.pop %v1665
        %v1791 = vrcp.pop %v1667
        %v1792 = vrcp.pop %v1669
        %v1793 = vrcp.pop %v1671
        %v1794 = vrcp.pop %v1673
        %v1795 = vrcp.pop %v1675
        %v1796 = vrcp.pop %v1677
        %v1797 = vrcp.pop %v1679
        %v1798 = vrcp.pop %v1681
        %v1799 = vrcp.pop %v1683
        %v1800 = vrcp.pop %v1685
        %v1801 = vrcp.pop %v1687
        %v1802 = vrcp.pop %v1689
        %v1803 = vrcp.pop %v1691
        %v1804 = vrcp.pop %v1693
        %v1805 = vrcp.pop %v1695
        %v1806 = vrcp.pop %v1697
        %v1807 = vrcp.pop %v1699
        %v1808 = vrcp.pop %v1701
        %v1809 = vrcp.pop %v1703
        %v1810 = vrcp.pop %v1705
        %v1811 = vrcp.pop %v1707
        %v1812 = vrcp.pop %v1709
        %v1813 = vrcp.pop %v1711
        %v1814 = vrcp.pop %v1713
        %v1815 = vrcp.pop %v1715
        %v1816 = vrcp.pop %v1717
        %v1817 = vrcp.pop %v1719
        %v1818 = vrcp.pop %v1721
        %v1819 = vrcp.pop %v1723
        %v1820 = vrcp.pop %v1725
        %v1821 = vrcp.pop %v1727
        %v1822 = vrcp.pop %v1729
        %v1823 = vrcp.pop %v1731
        %v1824 = vrcp.pop %v1733
        %v1825 = vrcp.pop %v1735
        %v1826 = vrcp.pop %v1737
        %v1827 = vrcp.pop %v1739
        %v1828 = vrcp.pop %v1741
        %v1829 = vrcp.pop %v1743
        %v1830 = vrcp.pop %v1745
        %v1831 = vrcp.pop %v1747
        %v1832 = vrcp.pop %v1749
        %v1833 = vrcp.pop %v1751
        %v1834 = vrcp.pop %v1753
        %v1835 = vrcp.pop %v1755
        %v1836 = vrcp.pop %v1757
        %v1837 = vrcp.pop %v1759
        %v1838 = vrcp.pop %v1761
        %v1839 = vrcp.pop %v1763
        %v1840 = vrcp.pop %v1765
        %v1841 = vrcp.pop %v1767
        %v1842 = vrcp.pop %v1769
        %v1843 = vrcp.pop %v1771
        %v1844 = vrcp.pop %v1773
        %v1845 = vrcp.pop %v1775
        %v1846 = vrcp.pop %v1777
        %v1847 = vrcp.pop %v1779
        %v1848 = vrcp.pop %v1781
        %v1849 = vrcp.pop %v1783
        %v1850 = vrcp.pop %v1785
        %v1851 = vrcp.pop %v1787
        %v1852 = vpack.c.bf16 %v1788, %v1788
        %v1853 = vpack.c.bf16 %v1789, %v1789
        %v1854 = vpack.c.bf16 %v1790, %v1790
        %v1855 = vpack.c.bf16 %v1791, %v1791
        %v1856 = vpack.c.bf16 %v1792, %v1792
        %v1857 = vpack.c.bf16 %v1793, %v1793
        %v1858 = vpack.c.bf16 %v1794, %v1794
        %v1859 = vpack.c.bf16 %v1795, %v1795
        %v1860 = vpack.c.bf16 %v1796, %v1796
        %v1861 = vpack.c.bf16 %v1797, %v1797
        %v1862 = vpack.c.bf16 %v1798, %v1798
        %v1863 = vpack.c.bf16 %v1799, %v1799
        %v1864 = vpack.c.bf16 %v1800, %v1800
        %v1865 = vpack.c.bf16 %v1801, %v1801
        %v1866 = vpack.c.bf16 %v1802, %v1802
        %v1867 = vpack.c.bf16 %v1803, %v1803
        %v1868 = vpack.c.bf16 %v1804, %v1804
        %v1869 = vpack.c.bf16 %v1805, %v1805
        %v1870 = vpack.c.bf16 %v1806, %v1806
        %v1871 = vpack.c.bf16 %v1807, %v1807
        %v1872 = vpack.c.bf16 %v1808, %v1808
        %v1873 = vpack.c.bf16 %v1809, %v1809
        %v1874 = vpack.c.bf16 %v1810, %v1810
        %v1875 = vpack.c.bf16 %v1811, %v1811
        %v1876 = vpack.c.bf16 %v1812, %v1812
        %v1877 = vpack.c.bf16 %v1813, %v1813
        %v1878 = vpack.c.bf16 %v1814, %v1814
        %v1879 = vpack.c.bf16 %v1815, %v1815
        %v1880 = vpack.c.bf16 %v1816, %v1816
        %v1881 = vpack.c.bf16 %v1817, %v1817
        %v1882 = vpack.c.bf16 %v1818, %v1818
        %v1883 = vpack.c.bf16 %v1819, %v1819
        %v1884 = vpack.c.bf16 %v1820, %v1820
        %v1885 = vpack.c.bf16 %v1821, %v1821
        %v1886 = vpack.c.bf16 %v1822, %v1822
        %v1887 = vpack.c.bf16 %v1823, %v1823
        %v1888 = vpack.c.bf16 %v1824, %v1824
        %v1889 = vpack.c.bf16 %v1825, %v1825
        %v1890 = vpack.c.bf16 %v1826, %v1826
        %v1891 = vpack.c.bf16 %v1827, %v1827
        %v1892 = vpack.c.bf16 %v1828, %v1828
        %v1893 = vpack.c.bf16 %v1829, %v1829
        %v1894 = vpack.c.bf16 %v1830, %v1830
        %v1895 = vpack.c.bf16 %v1831, %v1831
        %v1896 = vpack.c.bf16 %v1832, %v1832
        %v1897 = vpack.c.bf16 %v1833, %v1833
        %v1898 = vpack.c.bf16 %v1834, %v1834
        %v1899 = vpack.c.bf16 %v1835, %v1835
        %v1900 = vpack.c.bf16 %v1836, %v1836
        %v1901 = vpack.c.bf16 %v1837, %v1837
        %v1902 = vpack.c.bf16 %v1838, %v1838
        %v1903 = vpack.c.bf16 %v1839, %v1839
        %v1904 = vpack.c.bf16 %v1840, %v1840
        %v1905 = vpack.c.bf16 %v1841, %v1841
        %v1906 = vpack.c.bf16 %v1842, %v1842
        %v1907 = vpack.c.bf16 %v1843, %v1843
        %v1908 = vpack.c.bf16 %v1844, %v1844
        %v1909 = vpack.c.bf16 %v1845, %v1845
        %v1910 = vpack.c.bf16 %v1846, %v1846
        %v1911 = vpack.c.bf16 %v1847, %v1847
        %v1912 = vpack.c.bf16 %v1848, %v1848
        %v1913 = vpack.c.bf16 %v1849, %v1849
        %v1914 = vpack.c.bf16 %v1850, %v1850
        %v1915 = vpack.c.bf16 %v1851, %v1851
        %v1916 = vunpack.c.l.bf16 %v1852
        %v1917 = vunpack.c.l.bf16 %v1853
        %v1918 = vunpack.c.l.bf16 %v1854
        %v1919 = vunpack.c.l.bf16 %v1855
        %v1920 = vunpack.c.l.bf16 %v1856
        %v1921 = vunpack.c.l.bf16 %v1857
        %v1922 = vunpack.c.l.bf16 %v1858
        %v1923 = vunpack.c.l.bf16 %v1859
        %v1924 = vunpack.c.l.bf16 %v1860
        %v1925 = vunpack.c.l.bf16 %v1861
        %v1926 = vunpack.c.l.bf16 %v1862
        %v1927 = vunpack.c.l.bf16 %v1863
        %v1928 = vunpack.c.l.bf16 %v1864
        %v1929 = vunpack.c.l.bf16 %v1865
        %v1930 = vunpack.c.l.bf16 %v1866
        %v1931 = vunpack.c.l.bf16 %v1867
        %v1932 = vunpack.c.l.bf16 %v1868
        %v1933 = vunpack.c.l.bf16 %v1869
        %v1934 = vunpack.c.l.bf16 %v1870
        %v1935 = vunpack.c.l.bf16 %v1871
        %v1936 = vunpack.c.l.bf16 %v1872
        %v1937 = vunpack.c.l.bf16 %v1873
        %v1938 = vunpack.c.l.bf16 %v1874
        %v1939 = vunpack.c.l.bf16 %v1875
        %v1940 = vunpack.c.l.bf16 %v1876
        %v1941 = vunpack.c.l.bf16 %v1877
        %v1942 = vunpack.c.l.bf16 %v1878
        %v1943 = vunpack.c.l.bf16 %v1879
        %v1944 = vunpack.c.l.bf16 %v1880
        %v1945 = vunpack.c.l.bf16 %v1881
        %v1946 = vunpack.c.l.bf16 %v1882
        %v1947 = vunpack.c.l.bf16 %v1883
        %v1948 = vunpack.c.l.bf16 %v1884
        %v1949 = vunpack.c.l.bf16 %v1885
        %v1950 = vunpack.c.l.bf16 %v1886
        %v1951 = vunpack.c.l.bf16 %v1887
        %v1952 = vunpack.c.l.bf16 %v1888
        %v1953 = vunpack.c.l.bf16 %v1889
        %v1954 = vunpack.c.l.bf16 %v1890
        %v1955 = vunpack.c.l.bf16 %v1891
        %v1956 = vunpack.c.l.bf16 %v1892
        %v1957 = vunpack.c.l.bf16 %v1893
        %v1958 = vunpack.c.l.bf16 %v1894
        %v1959 = vunpack.c.l.bf16 %v1895
        %v1960 = vunpack.c.l.bf16 %v1896
        %v1961 = vunpack.c.l.bf16 %v1897
        %v1962 = vunpack.c.l.bf16 %v1898
        %v1963 = vunpack.c.l.bf16 %v1899
        %v1964 = vunpack.c.l.bf16 %v1900
        %v1965 = vunpack.c.l.bf16 %v1901
        %v1966 = vunpack.c.l.bf16 %v1902
        %v1967 = vunpack.c.l.bf16 %v1903
        %v1968 = vunpack.c.l.bf16 %v1904
        %v1969 = vunpack.c.l.bf16 %v1905
        %v1970 = vunpack.c.l.bf16 %v1906
        %v1971 = vunpack.c.l.bf16 %v1907
        %v1972 = vunpack.c.l.bf16 %v1908
        %v1973 = vunpack.c.l.bf16 %v1909
        %v1974 = vunpack.c.l.bf16 %v1910
        %v1975 = vunpack.c.l.bf16 %v1911
        %v1976 = vunpack.c.l.bf16 %v1912
        %v1977 = vunpack.c.l.bf16 %v1913
        %v1978 = vunpack.c.l.bf16 %v1914
        %v1979 = vunpack.c.l.bf16 %v1915
        %v1980 = vmul.f32 %v1596, %v1916
        %v1981 = vmul.f32 %v1597, %v1917
        %v1982 = vmul.f32 %v1598, %v1918
        %v1983 = vmul.f32 %v1599, %v1919
        %v1984 = vmul.f32 %v1600, %v1920
        %v1985 = vmul.f32 %v1601, %v1921
        %v1986 = vmul.f32 %v1602, %v1922
        %v1987 = vmul.f32 %v1603, %v1923
        %v1988 = vmul.f32 %v1604, %v1924
        %v1989 = vmul.f32 %v1605, %v1925
        %v1990 = vmul.f32 %v1606, %v1926
        %v1991 = vmul.f32 %v1607, %v1927
        %v1992 = vmul.f32 %v1608, %v1928
        %v1993 = vmul.f32 %v1609, %v1929
        %v1994 = vmul.f32 %v1610, %v1930
        %v1995 = vmul.f32 %v1611, %v1931
        %v1996 = vmul.f32 %v1612, %v1932
        %v1997 = vmul.f32 %v1613, %v1933
        %v1998 = vmul.f32 %v1614, %v1934
        %v1999 = vmul.f32 %v1615, %v1935
        %v2000 = vmul.f32 %v1616, %v1936
        %v2001 = vmul.f32 %v1617, %v1937
        %v2002 = vmul.f32 %v1618, %v1938
        %v2003 = vmul.f32 %v1619, %v1939
        %v2004 = vmul.f32 %v1620, %v1940
        %v2005 = vmul.f32 %v1621, %v1941
        %v2006 = vmul.f32 %v1622, %v1942
        %v2007 = vmul.f32 %v1623, %v1943
        %v2008 = vmul.f32 %v1624, %v1944
        %v2009 = vmul.f32 %v1625, %v1945
        %v2010 = vmul.f32 %v1626, %v1946
        %v2011 = vmul.f32 %v1627, %v1947
        %v2012 = vmul.f32 %v1628, %v1948
        %v2013 = vmul.f32 %v1629, %v1949
        %v2014 = vmul.f32 %v1630, %v1950
        %v2015 = vmul.f32 %v1631, %v1951
        %v2016 = vmul.f32 %v1632, %v1952
        %v2017 = vmul.f32 %v1633, %v1953
        %v2018 = vmul.f32 %v1634, %v1954
        %v2019 = vmul.f32 %v1635, %v1955
        %v2020 = vmul.f32 %v1636, %v1956
        %v2021 = vmul.f32 %v1637, %v1957
        %v2022 = vmul.f32 %v1638, %v1958
        %v2023 = vmul.f32 %v1639, %v1959
        %v2024 = vmul.f32 %v1640, %v1960
        %v2025 = vmul.f32 %v1641, %v1961
        %v2026 = vmul.f32 %v1642, %v1962
        %v2027 = vmul.f32 %v1643, %v1963
        %v2028 = vmul.f32 %v1644, %v1964
        %v2029 = vmul.f32 %v1645, %v1965
        %v2030 = vmul.f32 %v1646, %v1966
        %v2031 = vmul.f32 %v1647, %v1967
        %v2032 = vmul.f32 %v1648, %v1968
        %v2033 = vmul.f32 %v1649, %v1969
        %v2034 = vmul.f32 %v1650, %v1970
        %v2035 = vmul.f32 %v1651, %v1971
        %v2036 = vmul.f32 %v1652, %v1972
        %v2037 = vmul.f32 %v1653, %v1973
        %v2038 = vmul.f32 %v1654, %v1974
        %v2039 = vmul.f32 %v1655, %v1975
        %v2040 = vmul.f32 %v1656, %v1976
        %v2041 = vmul.f32 %v1657, %v1977
        %v2042 = vmul.f32 %v1658, %v1978
        %v2043 = vmul.f32 %v1659, %v1979
        %v2044 = vpack.c.bf16 %v1980, %v1980
        %v2045 = vpack.c.bf16 %v1981, %v1981
        %v2046 = vpack.c.bf16 %v1982, %v1982
        %v2047 = vpack.c.bf16 %v1983, %v1983
        %v2048 = vpack.c.bf16 %v1984, %v1984
        %v2049 = vpack.c.bf16 %v1985, %v1985
        %v2050 = vpack.c.bf16 %v1986, %v1986
        %v2051 = vpack.c.bf16 %v1987, %v1987
        %v2052 = vpack.c.bf16 %v1988, %v1988
        %v2053 = vpack.c.bf16 %v1989, %v1989
        %v2054 = vpack.c.bf16 %v1990, %v1990
        %v2055 = vpack.c.bf16 %v1991, %v1991
        %v2056 = vpack.c.bf16 %v1992, %v1992
        %v2057 = vpack.c.bf16 %v1993, %v1993
        %v2058 = vpack.c.bf16 %v1994, %v1994
        %v2059 = vpack.c.bf16 %v1995, %v1995
        %v2060 = vpack.c.bf16 %v1996, %v1996
        %v2061 = vpack.c.bf16 %v1997, %v1997
        %v2062 = vpack.c.bf16 %v1998, %v1998
        %v2063 = vpack.c.bf16 %v1999, %v1999
        %v2064 = vpack.c.bf16 %v2000, %v2000
        %v2065 = vpack.c.bf16 %v2001, %v2001
        %v2066 = vpack.c.bf16 %v2002, %v2002
        %v2067 = vpack.c.bf16 %v2003, %v2003
        %v2068 = vpack.c.bf16 %v2004, %v2004
        %v2069 = vpack.c.bf16 %v2005, %v2005
        %v2070 = vpack.c.bf16 %v2006, %v2006
        %v2071 = vpack.c.bf16 %v2007, %v2007
        %v2072 = vpack.c.bf16 %v2008, %v2008
        %v2073 = vpack.c.bf16 %v2009, %v2009
        %v2074 = vpack.c.bf16 %v2010, %v2010
        %v2075 = vpack.c.bf16 %v2011, %v2011
        %v2076 = vpack.c.bf16 %v2012, %v2012
        %v2077 = vpack.c.bf16 %v2013, %v2013
        %v2078 = vpack.c.bf16 %v2014, %v2014
        %v2079 = vpack.c.bf16 %v2015, %v2015
        %v2080 = vpack.c.bf16 %v2016, %v2016
        %v2081 = vpack.c.bf16 %v2017, %v2017
        %v2082 = vpack.c.bf16 %v2018, %v2018
        %v2083 = vpack.c.bf16 %v2019, %v2019
        %v2084 = vpack.c.bf16 %v2020, %v2020
        %v2085 = vpack.c.bf16 %v2021, %v2021
        %v2086 = vpack.c.bf16 %v2022, %v2022
        %v2087 = vpack.c.bf16 %v2023, %v2023
        %v2088 = vpack.c.bf16 %v2024, %v2024
        %v2089 = vpack.c.bf16 %v2025, %v2025
        %v2090 = vpack.c.bf16 %v2026, %v2026
        %v2091 = vpack.c.bf16 %v2027, %v2027
        %v2092 = vpack.c.bf16 %v2028, %v2028
        %v2093 = vpack.c.bf16 %v2029, %v2029
        %v2094 = vpack.c.bf16 %v2030, %v2030
        %v2095 = vpack.c.bf16 %v2031, %v2031
        %v2096 = vpack.c.bf16 %v2032, %v2032
        %v2097 = vpack.c.bf16 %v2033, %v2033
        %v2098 = vpack.c.bf16 %v2034, %v2034
        %v2099 = vpack.c.bf16 %v2035, %v2035
        %v2100 = vpack.c.bf16 %v2036, %v2036
        %v2101 = vpack.c.bf16 %v2037, %v2037
        %v2102 = vpack.c.bf16 %v2038, %v2038
        %v2103 = vpack.c.bf16 %v2039, %v2039
        %v2104 = vpack.c.bf16 %v2040, %v2040
        %v2105 = vpack.c.bf16 %v2041, %v2041
        %v2106 = vpack.c.bf16 %v2042, %v2042
        %v2107 = vpack.c.bf16 %v2043, %v2043
        %v2124 = vunpack.c.l.b16 %v2044
        %v2125 = vunpack.c.l.b16 %v2045
        %v2126 = vunpack.c.l.b16 %v2046
        %v2127 = vunpack.c.l.b16 %v2047
        %v2128 = vunpack.c.l.b16 %v2048
        %v2129 = vunpack.c.l.b16 %v2049
        %v2130 = vunpack.c.l.b16 %v2050
        %v2131 = vunpack.c.l.b16 %v2051
        %v2132 = vunpack.c.l.b16 %v2052
        %v2133 = vunpack.c.l.b16 %v2053
        %v2134 = vunpack.c.l.b16 %v2054
        %v2135 = vunpack.c.l.b16 %v2055
        %v2136 = vunpack.c.l.b16 %v2056
        %v2137 = vunpack.c.l.b16 %v2057
        %v2138 = vunpack.c.l.b16 %v2058
        %v2139 = vunpack.c.l.b16 %v2059
        %v2140 = vpack.c.b16 %v2125, %v2124
        %v2141 = vpack.c.b16 %v2127, %v2126
        %v2142 = vpack.c.b16 %v2129, %v2128
        %v2143 = vpack.c.b16 %v2131, %v2130
        %v2144 = vpack.c.b16 %v2133, %v2132
        %v2145 = vpack.c.b16 %v2135, %v2134
        %v2146 = vpack.c.b16 %v2137, %v2136
        %v2147 = vpack.c.b16 %v2139, %v2138
        %2156 = vmatpush.bf16.xpose.msra.mxu0 %v2147
        %2157 = vmatpush.bf16.xpose.msra.mxu0 %v2146
        %2158 = vmatpush.bf16.xpose.msra.mxu0 %v2145
        %2159 = vmatpush.bf16.xpose.msra.mxu0 %v2144
        %2160 = vmatpush.bf16.xpose.msra.mxu0 %v2143
        %2161 = vmatpush.bf16.xpose.msra.mxu0 %v2142
        %2162 = vmatpush.bf16.xpose.msra.mxu0 %v2141
        %2163 = vmatpush.bf16.xpose.msra.mxu0 %v2140
        %2164 = vmatmul.bf16.gmra.mxu0 %v514
        %v2165 = vpop.f32.mrf.mxu0
        %v2166 = vadd.f32 0.0, %v2165
        %v2167 = vpop.f32.mrf.mxu0
        %2168 = vdwg.mxu0
        %v2185 = vunpack.c.l.b16 %v2060
        %v2186 = vunpack.c.l.b16 %v2061
        %v2187 = vunpack.c.l.b16 %v2062
        %v2188 = vunpack.c.l.b16 %v2063
        %v2189 = vunpack.c.l.b16 %v2064
        %v2190 = vunpack.c.l.b16 %v2065
        %v2191 = vunpack.c.l.b16 %v2066
        %v2192 = vunpack.c.l.b16 %v2067
        %v2193 = vunpack.c.l.b16 %v2068
        %v2194 = vunpack.c.l.b16 %v2069
        %v2195 = vunpack.c.l.b16 %v2070
        %v2196 = vunpack.c.l.b16 %v2071
        %v2197 = vunpack.c.l.b16 %v2072
        %v2198 = vunpack.c.l.b16 %v2073
        %v2199 = vunpack.c.l.b16 %v2074
        %v2200 = vunpack.c.l.b16 %v2075
        %v2201 = vpack.c.b16 %v2186, %v2185
        %v2202 = vpack.c.b16 %v2188, %v2187
        %v2203 = vpack.c.b16 %v2190, %v2189
        %v2204 = vpack.c.b16 %v2192, %v2191
        %v2205 = vpack.c.b16 %v2194, %v2193
        %v2206 = vpack.c.b16 %v2196, %v2195
        %v2207 = vpack.c.b16 %v2198, %v2197
        %v2208 = vpack.c.b16 %v2200, %v2199
        %2217 = vmatpush.bf16.xpose.msra.mxu0 %v2208
        %2218 = vmatpush.bf16.xpose.msra.mxu0 %v2207
        %2219 = vmatpush.bf16.xpose.msra.mxu0 %v2206
        %2220 = vmatpush.bf16.xpose.msra.mxu0 %v2205
        %2221 = vmatpush.bf16.xpose.msra.mxu0 %v2204
        %2222 = vmatpush.bf16.xpose.msra.mxu0 %v2203
        %2223 = vmatpush.bf16.xpose.msra.mxu0 %v2202
        %2224 = vmatpush.bf16.xpose.msra.mxu0 %v2201
        %2225 = vmatmul.bf16.gmra.mxu0 %v515
        %v2226 = vpop.f32.mrf.mxu0
        %v2227 = vadd.f32 0.0, %v2226
        %v2228 = vpop.f32.mrf.mxu0
        %2229 = vdwg.mxu0
        %v2246 = vunpack.c.l.b16 %v2076
        %v2247 = vunpack.c.l.b16 %v2077
        %v2248 = vunpack.c.l.b16 %v2078
        %v2249 = vunpack.c.l.b16 %v2079
        %v2250 = vunpack.c.l.b16 %v2080
        %v2251 = vunpack.c.l.b16 %v2081
        %v2252 = vunpack.c.l.b16 %v2082
        %v2253 = vunpack.c.l.b16 %v2083
        %v2254 = vunpack.c.l.b16 %v2084
        %v2255 = vunpack.c.l.b16 %v2085
        %v2256 = vunpack.c.l.b16 %v2086
        %v2257 = vunpack.c.l.b16 %v2087
        %v2258 = vunpack.c.l.b16 %v2088
        %v2259 = vunpack.c.l.b16 %v2089
        %v2260 = vunpack.c.l.b16 %v2090
        %v2261 = vunpack.c.l.b16 %v2091
        %v2262 = vpack.c.b16 %v2247, %v2246
        %v2263 = vpack.c.b16 %v2249, %v2248
        %v2264 = vpack.c.b16 %v2251, %v2250
        %v2265 = vpack.c.b16 %v2253, %v2252
        %v2266 = vpack.c.b16 %v2255, %v2254
        %v2267 = vpack.c.b16 %v2257, %v2256
        %v2268 = vpack.c.b16 %v2259, %v2258
        %v2269 = vpack.c.b16 %v2261, %v2260
        %2278 = vmatpush.bf16.xpose.msra.mxu0 %v2269
        %2279 = vmatpush.bf16.xpose.msra.mxu0 %v2268
        %2280 = vmatpush.bf16.xpose.msra.mxu0 %v2267
        %2281 = vmatpush.bf16.xpose.msra.mxu0 %v2266
        %2282 = vmatpush.bf16.xpose.msra.mxu0 %v2265
        %2283 = vmatpush.bf16.xpose.msra.mxu0 %v2264
        %2284 = vmatpush.bf16.xpose.msra.mxu0 %v2263
        %2285 = vmatpush.bf16.xpose.msra.mxu0 %v2262
        %2286 = vmatmul.bf16.gmra.mxu0 %v516
        %v2287 = vpop.f32.mrf.mxu0
        %v2288 = vadd.f32 0.0, %v2287
        %v2289 = vpop.f32.mrf.mxu0
        %2290 = vdwg.mxu0
        %v2307 = vunpack.c.l.b16 %v2092
        %v2308 = vunpack.c.l.b16 %v2093
        %v2309 = vunpack.c.l.b16 %v2094
        %v2310 = vunpack.c.l.b16 %v2095
        %v2311 = vunpack.c.l.b16 %v2096
        %v2312 = vunpack.c.l.b16 %v2097
        %v2313 = vunpack.c.l.b16 %v2098
        %v2314 = vunpack.c.l.b16 %v2099
        %v2315 = vunpack.c.l.b16 %v2100
        %v2316 = vunpack.c.l.b16 %v2101
        %v2317 = vunpack.c.l.b16 %v2102
        %v2318 = vunpack.c.l.b16 %v2103
        %v2319 = vunpack.c.l.b16 %v2104
        %v2320 = vunpack.c.l.b16 %v2105
        %v2321 = vunpack.c.l.b16 %v2106
        %v2322 = vunpack.c.l.b16 %v2107
        %v2323 = vpack.c.b16 %v2308, %v2307
        %v2324 = vpack.c.b16 %v2310, %v2309
        %v2325 = vpack.c.b16 %v2312, %v2311
        %v2326 = vpack.c.b16 %v2314, %v2313
        %v2327 = vpack.c.b16 %v2316, %v2315
        %v2328 = vpack.c.b16 %v2318, %v2317
        %v2329 = vpack.c.b16 %v2320, %v2319
        %v2330 = vpack.c.b16 %v2322, %v2321
        %2339 = vmatpush.bf16.xpose.msra.mxu0 %v2330
        %2340 = vmatpush.bf16.xpose.msra.mxu0 %v2329
        %2341 = vmatpush.bf16.xpose.msra.mxu0 %v2328
        %2342 = vmatpush.bf16.xpose.msra.mxu0 %v2327
        %2343 = vmatpush.bf16.xpose.msra.mxu0 %v2326
        %2344 = vmatpush.bf16.xpose.msra.mxu0 %v2325
        %2345 = vmatpush.bf16.xpose.msra.mxu0 %v2324
        %2346 = vmatpush.bf16.xpose.msra.mxu0 %v2323
        %2347 = vmatmul.bf16.gmra.mxu0 %v517
        %v2348 = vpop.f32.mrf.mxu0
        %v2349 = vadd.f32 0.0, %v2348
        %v2350 = vpop.f32.mrf.mxu0
        %2351 = vdwg.mxu0
        %v2352 = vpack.c.bf16 %v2227, %v2166
        %v2353 = vpack.c.bf16 %v2349, %v2288
        %v2354 = vld [vmem:[#allocation7] sm:$0xf]
        %v2355 = vld [vmem:[#allocation7 + $0x4] sm:$0xf]
        %v2356 = vld [vmem:[#allocation7 + $0x8] sm:$0xf]
        %v2357 = vld [vmem:[#allocation7 + $0xc] sm:$0xf]
        %v2358 = vld [vmem:[%s6] sm:$0xff]
        %v2359 = vld [vmem:[%s6 + $0x8] sm:$0xff]
        %v2360 = vld [vmem:[%s6 + $0x10] sm:$0xff]
        %v2361 = vld [vmem:[%s6 + $0x18] sm:$0xff]
        %2363 = vset.pattern.permute.xlu0 0
        %2364 = vperm.xlu0 %2363, %v2358
        %v2365 = vpop.permute.xlu0 %2364
        %2368 = vset.pattern.permute.xlu0 0
        %2369 = vperm.xlu0 %2368, %v2359
        %v2370 = vpop.permute.xlu0 %2369
        %2373 = vset.pattern.permute.xlu0 0
        %2374 = vperm.xlu0 %2373, %v2360
        %v2375 = vpop.permute.xlu0 %2374
        %2378 = vset.pattern.permute.xlu0 0
        %2379 = vperm.xlu0 %2378, %v2361
        %v2380 = vpop.permute.xlu0 %2379
        %v2386 = vunpack.c.l.b16 %v2354
        %v2387 = vunpack.c.l.b16 %v2355
        %v2388 = vunpack.c.l.b16 %v2356
        %v2389 = vunpack.c.l.b16 %v2357
        %v2390 = vpack.c.b16 %v2387, %v2386
        %v2391 = vpack.c.b16 %v2389, %v2388
        %v2393 = vsel %vm476, %v2390, 0
        %v2396 = vsel %vm476, %v2391, 0
        %2398 = vmatpush.bf16.msra.mxu0 0
        %2399 = vmatpush.bf16.msra.mxu0 0
        %2400 = vmatpush.bf16.msra.mxu0 0
        %2401 = vmatpush.bf16.msra.mxu0 0
        %2402 = vmatpush.bf16.msra.mxu0 0
        %2403 = vmatpush.bf16.msra.mxu0 0
        %2404 = vmatpush.bf16.msra.mxu0 %v2353
        %2405 = vmatpush.bf16.msra.mxu0 %v2352
        %2406 = vmatmul.bf16.gmra.mxu0 %v2393
        %v2407 = vpop.f32.mrf.mxu0
        %v2408 = vadd.f32 %v2365, %v2407
        %v2409 = vpop.f32.mrf.mxu0
        %v2410 = vadd.f32 %v2370, %v2409
        %2411 = vmatmul.bf16.gmra.mxu0 %v2396
        %v2412 = vpop.f32.mrf.mxu0
        %v2413 = vadd.f32 %v2375, %v2412
        %v2414 = vpop.f32.mrf.mxu0
        %v2415 = vadd.f32 %v2380, %v2414
        %2416 = vdwg.mxu0
        %2417 = vst [vmem:[%s399] sm:$0xff] %v2408
        %2418 = vst [vmem:[%s399 + $0x8] sm:$0xff] %v2410
        %2419 = vst [vmem:[%s399 + $0x10] sm:$0xff] %v2413
        %2420 = vst [vmem:[%s399 + $0x18] sm:$0xff] %v2415
        %s2421 = sand.u32 %s214, 1
        %s2422 = scalar_lea.sflag [#allocation4], %s2421
        %s2423 = sand.u32 %s214, 1
        %s2424 = smul.addr %s2423, 32
        %s2425 = scalar_lea.vmem [#allocation8], %s2424
        %s2426 = sand.u32 %s242, 1
        %s2427 = scalar_lea.sflag [#allocation10], %s2426
        %s2428 = sand.u32 %s242, 1
        %s2429 = smul.addr %s2428, 256
        %s2430 = scalar_lea.vmem [#allocation9], %s2429
        // Predicated region
        $region61: #{tpu_custom_call.1} parent=47 // pred_check
          %p2431 = pneg %p224
        $region62: #{tpu_custom_call.1} parent=47 // pred_check_branch
          %2433 = sbr.rel (%p2431) target = $region64
        $region63: #{tpu_custom_call.1} parent=47 // pred_region
          %2435 = vsyncadd %s2422, 0
          %s2436 = smul.addr %s32, 4
          %s2437 = sadd.s32 %s33, %s2436
          %s2438 = smul.addr %s2437, 8
          %s2439 = scalar_lea.hbm %s7, %s2438
          %s2440 = sshll.u32 %s2425, 4
          %s2441 = int_to_ptr.vmem [resolvable:$true] %s2440
          %s2442 = sshll.u32 %s2439, 4
          %s2443 = int_to_ptr.hbm [resolvable:$true] %s2442
          %2448 = dma.vmem_to_hbm [thread:$0]  %s2441, 512, %s2443, %s2422, 128, 128, 8
        $region64: #{tpu_custom_call.1} parent=47 // pred_fallthru
          _
        // Predicated region
        $region65: #{tpu_custom_call.1} parent=47 // pred_check
          %p2449 = pneg %p252
        $region66: #{tpu_custom_call.1} parent=47 // pred_check_branch
          %2451 = sbr.rel (%p2449) target = $region68
        $region67: #{tpu_custom_call.1} parent=47 // pred_region
          %s2452 = smul.u32 16, %s33
          %2454 = vsyncadd %s2427, 0
          %s2455 = smul.addr %s32, 64
          %s2456 = sadd.s32 %s2452, %s2455
          %s2457 = smul.addr %s2456, 4
          %s2458 = scalar_lea.hbm %s8, %s2457
          %s2459 = sshll.u32 %s2430, 4
          %s2460 = int_to_ptr.vmem [resolvable:$true] %s2459
          %s2461 = sshll.u32 %s2458, 4
          %s2462 = int_to_ptr.hbm [resolvable:$true] %s2461
          %2467 = dma.vmem_to_hbm [thread:$0]  %s2460, 4096, %s2462, %s2427, 64, 64, 4
        $region68: #{tpu_custom_call.1} parent=47 // pred_fallthru
          _
      $region48: #{tpu_custom_call.1} parent=5 // pred_fallthru
        _
      %p2468 = scmp.le.s32.totalorder 2, %s23
      // Predicated region
      $region69: #{tpu_custom_call.1} parent=5 // pred_check
        %p2469 = pneg %p2468
      $region70: #{tpu_custom_call.1} parent=5 // pred_check_branch
        %2471 = sbr.rel (%p2469) target = $region72
      $region71: #{tpu_custom_call.1} parent=5 // pred_region
        %s2472 = ssub.s32 %s23, 2
        // Predicated region
        $region73: #{tpu_custom_call.1} parent=71 // pred_check
          %p2473 = pneg %p230
        $region74: #{tpu_custom_call.1} parent=71 // pred_check_branch
          %2475 = sbr.rel (%p2473) target = $region76
        $region75: #{tpu_custom_call.1} parent=71 // pred_region
          %s2476 = sand.u32 %s215, 1
          %s2477 = scalar_lea.sflag [#allocation4], %s2476
          %s2478 = sand.u32 %s215, 1
          %s2479 = smul.addr %s2478, 32
          %s2480 = scalar_lea.vmem [#allocation8], %s2479
          %2482 = dma.done %s2477, 512
        $region76: #{tpu_custom_call.1} parent=71 // pred_fallthru
          _
        // Predicated region
        $region77: #{tpu_custom_call.1} parent=71 // pred_check
          %p2483 = pneg %p258
        $region78: #{tpu_custom_call.1} parent=71 // pred_check_branch
          %2485 = sbr.rel (%p2483) target = $region80
        $region79: #{tpu_custom_call.1} parent=71 // pred_region
          %s2486 = sand.u32 %s243, 1
          %s2487 = scalar_lea.sflag [#allocation10], %s2486
          %s2488 = sand.u32 %s243, 1
          %s2489 = smul.addr %s2488, 256
          %s2490 = scalar_lea.vmem [#allocation9], %s2489
          %2492 = dma.done %s2487, 4096
        $region80: #{tpu_custom_call.1} parent=71 // pred_fallthru
          _
      $region72: #{tpu_custom_call.1} parent=5 // pred_fallthru
        _
    $region6: #{tpu_custom_call.1} parent=1 // loop_footer
      %s27 = sadd.s32 1, %s23
    $region7: #{tpu_custom_call.1} parent=1 // loop_footer_branch
      %22 = sbr.rel target = $region3
    $region8: #{tpu_custom_call.1} parent=1 // loop_exit
      _
    %2493 = vsyncpa [#allocation3], 1
    %s2494 = scalar_lea.sflag [#allocation3], 1
    %2495 = vsyncpa %s2494, 1
    %2496 = vsyncpa [#allocation6], 1
    %2497 = vsyncpa [#allocation4], 1
    %s2498 = scalar_lea.sflag [#allocation4], 1
    %2499 = vsyncpa %s2498, 1
    %2500 = vsyncpa [#allocation10], 1
    %s2501 = scalar_lea.sflag [#allocation10], 1
    %2502 = vsyncpa %s2501, 1

</llo_original>
